<compile_context>
chip_gen: v5e
topology: v5e:2x2
jax: 0.10.0
libtpu: 0.0.40
codegen_flags: <defaults>
</compile_context>

<pallas_src>
import jax
import jax.numpy as jnp
from jax.experimental import pallas as pl
from jax.experimental.pallas import tpu as pltpu


# ---------------------------------------------------------------------------
# Kernels
# ---------------------------------------------------------------------------
def _hidden_stack(x_ref, w1_ref, b1_ref, w2_ref, b2_ref):
    """fc1 (VPU broadcast-MACs) + ReLU, then fc2 (MXU 32x32) + ReLU.

    Returns the (tile, hidden) float32 activation.
    """
    x = x_ref[...]                          # (tile, in_size)
    w1 = w1_ref[...]                        # (in_size, hidden)
    in_size = x.shape[1]

    # fc1: K is tiny (6) -> skip the MXU, accumulate K broadcast-MACs on the VPU.
    h = b1_ref[...] + x[:, 0:1] * w1[0:1, :]
    for k in range(1, in_size):             # static unroll, in_size iterations
        h = h + x[:, k:k + 1] * w1[k:k + 1, :]
    h = jnp.maximum(h, 0.0)

    # fc2: the one matmul worth the MXU (hidden x hidden).
    h = jnp.dot(h, w2_ref[...], preferred_element_type=jnp.float32)
    return jnp.maximum(h + b2_ref[...], 0.0)


def mvn_kernel_packed(x_ref, w1_ref, b1_ref, w2_ref, b2_ref, w3t_ref, b3_ref,
                      o_ref):
    """output_size == 1: fc3 as VPU mul + lane reduce; 128 results per lane row.

    o_ref block is (tile//128, 128): element (r, c) holds batch row r*128 + c.
    """
    h = _hidden_stack(x_ref, w1_ref, b1_ref, w2_ref, b2_ref)   # (tile, hidden)
    rows, lanes = o_ref.shape                                  # lanes == 128
    hidden = h.shape[1]
    # Leading split at a 128-row (sublane-tile) boundary: layout no-op.
    hr = h.reshape(rows, lanes, hidden)                        # (rows, 128, hidden)
    w3row = w3t_ref[...].reshape(1, 1, hidden)                 # (1, hidden) -> (1,1,hidden)
    out = jnp.sum(hr * w3row, axis=-1) + b3_ref[...]           # (rows,128) + (1,1)
    o_ref[...] = out.astype(o_ref.dtype)


def mvn_kernel_wide(x_ref, w1_ref, b1_ref, w2_ref, b2_ref, w3_ref, b3_ref,
                    o_ref):
    """Generic output_size: fc3 on the MXU into a lane-padded (tile, out_pad) slab."""
    h = _hidden_stack(x_ref, w1_ref, b1_ref, w2_ref, b2_ref)
    h = jnp.dot(h, w3_ref[...], preferred_element_type=jnp.float32)
    o_ref[...] = (h + b3_ref[...]).astype(o_ref.dtype)


# ---------------------------------------------------------------------------
# Wrapper
# ---------------------------------------------------------------------------
def _round_up(n, m):
    return ((n + m - 1) // m) * m


def _choose_tile(batch, tile_cap, min_steps):
    """Batch tile: one grid step when possible; 1024-row multiples when streaming."""
    steps = max(min_steps, pl.cdiv(batch, tile_cap))
    if steps <= 1:
        # Single block; packed output needs the block batch dim % 128 == 0.
        return max(128, _round_up(batch, 128))
    # Multi-step: packed out block rows (tile//128) must be a multiple of 8.
    return max(1024, _round_up(pl.cdiv(batch, steps), 1024))


def meta_value_network_forward(x, params, *, tile_cap=4096, min_steps=1):
    """Forward pass of MetaValueNetwork.

    x: [B, input_size] float32.
    params: weights pre-transposed to [in, out], biases as [1, out].
    tile_cap: max batch rows per grid step (4096 keeps VMEM use ~4 MiB, safe on v7x).
    min_steps: set to 2 on v7x for large batches so the "parallel" axis feeds
        both TensorCores; leave at 1 on v5e/v6e (single step is strictly best).
    """
    w1, b1, w2, b2, w3, b3 = (params["w1"], params["b1"], params["w2"],
                              params["b2"], params["w3"], params["b3"])
    B, in_size = x.shape
    hidden = w1.shape[1]
    out_size = w3.shape[1]

    tile = _choose_tile(B, tile_cap, min_steps)
    grid = pl.cdiv(B, tile)

    stream = lambda shape: pl.BlockSpec(shape, lambda i: (i, 0))
    resident = lambda a: pl.BlockSpec(a.shape, lambda i: (0, 0))
    cparams = pltpu.CompilerParams(dimension_semantics=("parallel",))

    if out_size == 1:
        # Packed, lane-dense output: 4 B of HBM writeback per batch row.
        rows = tile // 128
        w3t = w3.reshape(1, hidden)          # (hidden, 1) -> (1, hidden), trace-time
        out_packed = pl.pallas_call(
            mvn_kernel_packed,
            out_shape=jax.ShapeDtypeStruct((grid * rows, 128), x.dtype),
            grid=(grid,),
            in_specs=[
                stream((tile, in_size)),
                resident(w1), resident(b1),
                resident(w2), resident(b2),
                resident(w3t), resident(b3),
            ],
            out_specs=stream((rows, 128)),
            compiler_params=cparams,
        )(x, w1, b1, w2, b2, w3t, b3)
        # Unpack: (grid*rows, 128) row-major == batch order; drop padded tail rows.
        return out_packed.reshape(-1, 1)[:B]

    # Generic output_size fallback: lane-padded fc3 slab, sliced outside.
    out_pad = _round_up(out_size, 128)
    w3p = jnp.pad(w3, ((0, 0), (0, out_pad - out_size)))
    b3p = jnp.pad(b3, ((0, 0), (0, out_pad - out_size)))
    out_full = pl.pallas_call(
        mvn_kernel_wide,
        out_shape=jax.ShapeDtypeStruct((grid * tile, out_pad), x.dtype),
        grid=(grid,),
        in_specs=[
            stream((tile, in_size)),
            resident(w1), resident(b1),
            resident(w2), resident(b2),
            resident(w3p), resident(b3p),
        ],
        out_specs=stream((tile, out_pad)),
        compiler_params=cparams,
    )(x, w1, b1, w2, b2, w3p, b3p)
    return out_full[:B, :out_size]


# ---------------------------------------------------------------------------
# Reference & init (PyTorch nn.Linear-style)
# ---------------------------------------------------------------------------
def reference_forward(x, params):
    hp = jax.lax.Precision.HIGHEST   # exact f32 matmuls for the check
    h = jnp.maximum(jnp.dot(x, params["w1"], precision=hp) + params["b1"], 0.0)
    h = jnp.maximum(jnp.dot(h, params["w2"], precision=hp) + params["b2"], 0.0)
    return jnp.dot(h, params["w3"], precision=hp) + params["b3"]


def init_params(key, input_size, hidden_size, output_size):
    """U(-1/sqrt(fan_in), +1/sqrt(fan_in)) like nn.Linear; weights stored [in, out]."""
    def linear(k, fan_in, fan_out):
        kw, kb = jax.random.split(k)
        bound = 1.0 / jnp.sqrt(jnp.float32(fan_in))
        w = jax.random.uniform(kw, (fan_in, fan_out), jnp.float32, -bound, bound)
        b = jax.random.uniform(kb, (1, fan_out), jnp.float32, -bound, bound)
        return w, b

    k1, k2, k3 = jax.random.split(key, 3)
    w1, b1 = linear(k1, input_size, hidden_size)
    w2, b2 = linear(k2, hidden_size, hidden_size)
    w3, b3 = linear(k3, hidden_size, output_size)
    return {"w1": w1, "b1": b1, "w2": w2, "b2": b2, "w3": w3, "b3": b3}


if __name__ == "__main__":
    # Cartpole meta-value net: input = state(4) + action one-hot(2), hidden=32, output=1.
    input_size, hidden_size, output_size = 6, 32, 1
    batch = 200   # not a multiple of 128: exercises the ragged block + lane packing

    key = jax.random.PRNGKey(0)
    k_params, k_x, k_p2, k_x2 = jax.random.split(key, 4)
    params = init_params(k_params, input_size, hidden_size, output_size)
    x = jax.random.normal(k_x, (batch, input_size), jnp.float32)

    out = jax.block_until_ready(meta_value_network_forward(x, params))
    ref = reference_forward(x, params)
    assert out.shape == (batch, output_size)
    # fc2 goes through the MXU's multi-pass f32 path; reference uses HIGHEST.
    assert jnp.allclose(out, ref, atol=1e-4, rtol=1e-4), \
        float(jnp.max(jnp.abs(out - ref)))

    # Generic-output fallback path (output_size > 1, lane-padded store).
    params3 = init_params(k_p2, input_size, hidden_size, 3)
    x2 = jax.random.normal(k_x2, (37, input_size), jnp.float32)
    out3 = jax.block_until_ready(meta_value_network_forward(x2, params3))
    ref3 = reference_forward(x2, params3)
    assert out3.shape == (37, 3)
    assert jnp.allclose(out3, ref3, atol=1e-4, rtol=1e-4), \
        float(jnp.max(jnp.abs(out3 - ref3)))

    print("KERNEL_OK")
</pallas_src>

<mosaic_0001>
module attributes {stable_mosaic.version = 11 : i64} {
  func.func @mvn_kernel_packed(%arg0: i32, %arg1: memref<256x6xf32, #tpu.memory_space<vmem>>, %arg2: memref<6x32xf32, #tpu.memory_space<vmem>>, %arg3: memref<1x32xf32, #tpu.memory_space<vmem>>, %arg4: memref<32x32xf32, #tpu.memory_space<vmem>>, %arg5: memref<1x32xf32, #tpu.memory_space<vmem>>, %arg6: memref<1x32xf32, #tpu.memory_space<vmem>>, %arg7: memref<1x1xf32, #tpu.memory_space<vmem>>, %arg8: memref<2x128xf32, #tpu.memory_space<vmem>>) attributes {dimension_semantics = [#tpu.dimension_semantics<parallel>], iteration_bounds = array<i64: 1>, scalar_prefetch = 0 : i64, scratch_operands = 0 : i64, tpu.core_type = #tpu.core_type<tc>, window_params = [{transform_indices = @transform_0, window_bounds = array<i64: 256, 6>}, {pipeline_mode = #tpu.pipeline_mode<synchronous>, transform_indices = @transform_1, window_bounds = array<i64: 6, 32>}, {pipeline_mode = #tpu.pipeline_mode<synchronous>, transform_indices = @transform_2, window_bounds = array<i64: 1, 32>}, {pipeline_mode = #tpu.pipeline_mode<synchronous>, transform_indices = @transform_3, window_bounds = array<i64: 32, 32>}, {pipeline_mode = #tpu.pipeline_mode<synchronous>, transform_indices = @transform_4, window_bounds = array<i64: 1, 32>}, {pipeline_mode = #tpu.pipeline_mode<synchronous>, transform_indices = @transform_5, window_bounds = array<i64: 1, 32>}, {pipeline_mode = #tpu.pipeline_mode<synchronous>, transform_indices = @transform_6, window_bounds = array<i64: 1, 1>}, {transform_indices = @transform_7, window_bounds = array<i64: 2, 128>}]} {
    %c0 = arith.constant 0 : index
    %c0_0 = arith.constant 0 : index
    %0 = vector.load %arg1[%c0, %c0_0] : memref<256x6xf32, #tpu.memory_space<vmem>>, vector<256x6xf32>
    %c0_1 = arith.constant 0 : index
    %c0_2 = arith.constant 0 : index
    %1 = vector.load %arg2[%c0_1, %c0_2] : memref<6x32xf32, #tpu.memory_space<vmem>>, vector<6x32xf32>
    %c0_3 = arith.constant 0 : index
    %c0_4 = arith.constant 0 : index
    %2 = vector.load %arg3[%c0_3, %c0_4] : memref<1x32xf32, #tpu.memory_space<vmem>>, vector<1x32xf32>
    %3 = vector.extract_strided_slice %0 {offsets = [0, 0], sizes = [256, 1], strides = [1, 1]} : vector<256x6xf32> to vector<256x1xf32>
    %4 = vector.extract_strided_slice %1 {offsets = [0, 0], sizes = [1, 32], strides = [1, 1]} : vector<6x32xf32> to vector<1x32xf32>
    %5 = vector.broadcast %3 : vector<256x1xf32> to vector<256x32xf32>
    %6 = vector.broadcast %4 : vector<1x32xf32> to vector<256x32xf32>
    %7 = arith.mulf %5, %6 : vector<256x32xf32>
    %8 = vector.broadcast %2 : vector<1x32xf32> to vector<256x32xf32>
    %9 = arith.addf %8, %7 : vector<256x32xf32>
    %10 = vector.extract_strided_slice %0 {offsets = [0, 1], sizes = [256, 1], strides = [1, 1]} : vector<256x6xf32> to vector<256x1xf32>
    %11 = vector.extract_strided_slice %1 {offsets = [1, 0], sizes = [1, 32], strides = [1, 1]} : vector<6x32xf32> to vector<1x32xf32>
    %12 = vector.broadcast %10 : vector<256x1xf32> to vector<256x32xf32>
    %13 = vector.broadcast %11 : vector<1x32xf32> to vector<256x32xf32>
    %14 = arith.mulf %12, %13 : vector<256x32xf32>
    %15 = arith.addf %9, %14 : vector<256x32xf32>
    %16 = vector.extract_strided_slice %0 {offsets = [0, 2], sizes = [256, 1], strides = [1, 1]} : vector<256x6xf32> to vector<256x1xf32>
    %17 = vector.extract_strided_slice %1 {offsets = [2, 0], sizes = [1, 32], strides = [1, 1]} : vector<6x32xf32> to vector<1x32xf32>
    %18 = vector.broadcast %16 : vector<256x1xf32> to vector<256x32xf32>
    %19 = vector.broadcast %17 : vector<1x32xf32> to vector<256x32xf32>
    %20 = arith.mulf %18, %19 : vector<256x32xf32>
    %21 = arith.addf %15, %20 : vector<256x32xf32>
    %22 = vector.extract_strided_slice %0 {offsets = [0, 3], sizes = [256, 1], strides = [1, 1]} : vector<256x6xf32> to vector<256x1xf32>
    %23 = vector.extract_strided_slice %1 {offsets = [3, 0], sizes = [1, 32], strides = [1, 1]} : vector<6x32xf32> to vector<1x32xf32>
    %24 = vector.broadcast %22 : vector<256x1xf32> to vector<256x32xf32>
    %25 = vector.broadcast %23 : vector<1x32xf32> to vector<256x32xf32>
    %26 = arith.mulf %24, %25 : vector<256x32xf32>
    %27 = arith.addf %21, %26 : vector<256x32xf32>
    %28 = vector.extract_strided_slice %0 {offsets = [0, 4], sizes = [256, 1], strides = [1, 1]} : vector<256x6xf32> to vector<256x1xf32>
    %29 = vector.extract_strided_slice %1 {offsets = [4, 0], sizes = [1, 32], strides = [1, 1]} : vector<6x32xf32> to vector<1x32xf32>
    %30 = vector.broadcast %28 : vector<256x1xf32> to vector<256x32xf32>
    %31 = vector.broadcast %29 : vector<1x32xf32> to vector<256x32xf32>
    %32 = arith.mulf %30, %31 : vector<256x32xf32>
    %33 = arith.addf %27, %32 : vector<256x32xf32>
    %34 = vector.extract_strided_slice %0 {offsets = [0, 5], sizes = [256, 1], strides = [1, 1]} : vector<256x6xf32> to vector<256x1xf32>
    %35 = vector.extract_strided_slice %1 {offsets = [5, 0], sizes = [1, 32], strides = [1, 1]} : vector<6x32xf32> to vector<1x32xf32>
    %36 = vector.broadcast %34 : vector<256x1xf32> to vector<256x32xf32>
    %37 = vector.broadcast %35 : vector<1x32xf32> to vector<256x32xf32>
    %38 = arith.mulf %36, %37 : vector<256x32xf32>
    %39 = arith.addf %33, %38 : vector<256x32xf32>
    %cst = arith.constant 0.000000e+00 : f32
    %40 = vector.broadcast %cst : f32 to vector<256x32xf32>
    %41 = arith.maximumf %39, %40 : vector<256x32xf32>
    %c0_5 = arith.constant 0 : index
    %c0_6 = arith.constant 0 : index
    %42 = vector.load %arg4[%c0_5, %c0_6] : memref<32x32xf32, #tpu.memory_space<vmem>>, vector<32x32xf32>
    %cst_7 = arith.constant dense<0.000000e+00> : vector<256x32xf32>
    %43 = tpu.matmul %41, %42, %cst_7 {dimension_numbers = #tpu.dot_dimension_numbers<[1], [0], [0], [1], [0, 0, 1, 1], [], []>} : vector<256x32xf32>, vector<32x32xf32>, vector<256x32xf32> -> vector<256x32xf32>
    %c0_8 = arith.constant 0 : index
    %c0_9 = arith.constant 0 : index
    %44 = vector.load %arg5[%c0_8, %c0_9] : memref<1x32xf32, #tpu.memory_space<vmem>>, vector<1x32xf32>
    %45 = vector.broadcast %44 : vector<1x32xf32> to vector<256x32xf32>
    %46 = arith.addf %43, %45 : vector<256x32xf32>
    %cst_10 = arith.constant 0.000000e+00 : f32
    %47 = vector.broadcast %cst_10 : f32 to vector<256x32xf32>
    %48 = arith.maximumf %46, %47 : vector<256x32xf32>
    %49 = vector.shape_cast %48 : vector<256x32xf32> to vector<2x128x32xf32>
    %c0_11 = arith.constant 0 : index
    %c0_12 = arith.constant 0 : index
    %50 = vector.load %arg6[%c0_11, %c0_12] : memref<1x32xf32, #tpu.memory_space<vmem>>, vector<1x32xf32>
    %51 = vector.shape_cast %50 : vector<1x32xf32> to vector<1x1x32xf32>
    %52 = vector.broadcast %51 : vector<1x1x32xf32> to vector<2x128x32xf32>
    %53 = arith.mulf %49, %52 : vector<2x128x32xf32>
    %cst_13 = arith.constant dense<0.000000e+00> : vector<2x128xf32>
    %54 = vector.multi_reduction <add>, %53, %cst_13 [2] : vector<2x128x32xf32> to vector<2x128xf32>
    %c0_14 = arith.constant 0 : index
    %c0_15 = arith.constant 0 : index
    %55 = vector.load %arg7[%c0_14, %c0_15] : memref<1x1xf32, #tpu.memory_space<vmem>>, vector<1x1xf32>
    %56 = vector.broadcast %55 : vector<1x1xf32> to vector<2x128xf32>
    %57 = arith.addf %54, %56 : vector<2x128xf32>
    %c0_16 = arith.constant 0 : index
    %c0_17 = arith.constant 0 : index
    %58 = vector.load %arg8[%c0_16, %c0_17] : memref<2x128xf32, #tpu.memory_space<vmem>>, vector<2x128xf32>
    tpu.vector_store %arg8[%c0_16, %c0_17], %57 {strides = array<i32>} : memref<2x128xf32, #tpu.memory_space<vmem>>, vector<2x128xf32>,
    return
  }
  func.func @transform_0(%arg0: i32) -> (i32, i32) {
    %c0_i32 = arith.constant 0 : i32
    %c0_i32_0 = arith.constant 0 : i32
    return %arg0, %c0_i32 : i32, i32
  }
  func.func @transform_1(%arg0: i32) -> (i32, i32) {
    %c0_i32 = arith.constant 0 : i32
    %c0_i32_0 = arith.constant 0 : i32
    %c0_i32_1 = arith.constant 0 : i32
    return %c0_i32, %c0_i32_0 : i32, i32
  }
  func.func @transform_2(%arg0: i32) -> (i32, i32) {
    %c0_i32 = arith.constant 0 : i32
    %c0_i32_0 = arith.constant 0 : i32
    %c0_i32_1 = arith.constant 0 : i32
    return %c0_i32, %c0_i32_0 : i32, i32
  }
  func.func @transform_3(%arg0: i32) -> (i32, i32) {
    %c0_i32 = arith.constant 0 : i32
    %c0_i32_0 = arith.constant 0 : i32
    %c0_i32_1 = arith.constant 0 : i32
    return %c0_i32, %c0_i32_0 : i32, i32
  }
  func.func @transform_4(%arg0: i32) -> (i32, i32) {
    %c0_i32 = arith.constant 0 : i32
    %c0_i32_0 = arith.constant 0 : i32
    %c0_i32_1 = arith.constant 0 : i32
    return %c0_i32, %c0_i32_0 : i32, i32
  }
  func.func @transform_5(%arg0: i32) -> (i32, i32) {
    %c0_i32 = arith.constant 0 : i32
    %c0_i32_0 = arith.constant 0 : i32
    %c0_i32_1 = arith.constant 0 : i32
    return %c0_i32, %c0_i32_0 : i32, i32
  }
  func.func @transform_6(%arg0: i32) -> (i32, i32) {
    %c0_i32 = arith.constant 0 : i32
    %c0_i32_0 = arith.constant 0 : i32
    %c0_i32_1 = arith.constant 0 : i32
    return %c0_i32, %c0_i32_0 : i32, i32
  }
  func.func @transform_7(%arg0: i32) -> (i32, i32) {
    %c0_i32 = arith.constant 0 : i32
    %c0_i32_0 = arith.constant 0 : i32
    return %arg0, %c0_i32 : i32, i32
  }
}

</mosaic_0001>

<llo_original>
// kernel: tpu_custom_call.1
$region0: #{tpu_custom_call.1}
  #allocation0 [shape = 'u32[]', space=smem, size = 0x4, offset = 0x4, fixed_abs, tag = 'smem constant byte address 0x4 - core index']
  #allocation1 [shape = 'u32[72,128]{1,0:T(1,128)}', space=vmem, size = 0x9000, scoped, tag = 'internal scratch']
  #allocation2 [shape = 'f32[1,1]{1,0:T(1,128)S(1)}', space=vmem, size = 0x200, scoped, tag = 'scoped memory for tpu_custom_call.1']
  %s0 = inlined_call_operand.vmem [shape: f32[200,6], index: 0, kind: input, shape index: {}]
  %s1 = inlined_call_operand.vmem [shape: f32[6,32], index: 1, kind: input, shape index: {}]
  %s2 = inlined_call_operand.vmem [shape: f32[1,32], index: 2, kind: input, shape index: {}]
  %s3 = inlined_call_operand.vmem [shape: f32[32,32], index: 3, kind: input, shape index: {}]
  %s4 = inlined_call_operand.vmem [shape: f32[1,32], index: 4, kind: input, shape index: {}]
  %s5 = inlined_call_operand.vmem [shape: f32[1,32], index: 5, kind: input, shape index: {}]
  %s6 = inlined_call_operand.<no memory space> [shape: f32[1,1], index: 6, kind: input, shape index: {}]
  %s7 = inlined_call_operand.hbm [shape: f32[2,128], index: 7, kind: output, shape index: {}]
  %s8 = sld [smem:[#allocation0]]
  $region38: #{tpu_custom_call.1} parent=0
    _
  %s10 = ssub.s32 1, %s8
  %s11 = scalar_select 0, %s10, %s8
  %v12 = vstv %s6
  %13 = vst [vmem:[#allocation2] sm:$0x1] %v12
  $region1: #{tpu_custom_call.1} parent=0
    #allocation3 [shape = 'u8[1024]{0}', space=vmem, size = 0x400, scoped, tag = 'output window, operand 0, single buffered']
    #allocation4 [shape = 's32[1]{0}', space=sflag, size = 0x4, scoped, tag = 'scoped memory for tpu_custom_call.1']
    %14 = vsyncpa [#allocation4], 0
    // Predicated region
    $region2: #{tpu_custom_call.1} parent=1 // pred_check
      _
    $region3: #{tpu_custom_call.1} parent=1 // pred_check_branch
      %16 = sbr.rel (0) target = $region5
    $region4: #{tpu_custom_call.1} parent=1 // pred_region
      _
    $region5: #{tpu_custom_call.1} parent=1 // pred_fallthru
      _
    // Predicated region
    $region6: #{tpu_custom_call.1} parent=1 // pred_check
      _
    $region7: #{tpu_custom_call.1} parent=1 // pred_check_branch
      %18 = sbr.rel (0) target = $region9
    $region8: #{tpu_custom_call.1} parent=1 // pred_region
      _
    $region9: #{tpu_custom_call.1} parent=1 // pred_fallthru
      _
    // Predicated region
    $region10: #{tpu_custom_call.1} parent=1 // pred_check
      _
    $region11: #{tpu_custom_call.1} parent=1 // pred_check_branch
      %20 = sbr.rel (0) target = $region13
    $region12: #{tpu_custom_call.1} parent=1 // pred_region
      _
    $region13: #{tpu_custom_call.1} parent=1 // pred_fallthru
      _
    // Predicated region
    $region14: #{tpu_custom_call.1} parent=1 // pred_check
      _
    $region15: #{tpu_custom_call.1} parent=1 // pred_check_branch
      %22 = sbr.rel (0) target = $region17
    $region16: #{tpu_custom_call.1} parent=1 // pred_region
      _
    $region17: #{tpu_custom_call.1} parent=1 // pred_fallthru
      _
    // Predicated region
    $region18: #{tpu_custom_call.1} parent=1 // pred_check
      _
    $region19: #{tpu_custom_call.1} parent=1 // pred_check_branch
      %24 = sbr.rel (0) target = $region21
    $region20: #{tpu_custom_call.1} parent=1 // pred_region
      _
    $region21: #{tpu_custom_call.1} parent=1 // pred_fallthru
      _
    // Predicated region
    $region22: #{tpu_custom_call.1} parent=1 // pred_check
      _
    $region23: #{tpu_custom_call.1} parent=1 // pred_check_branch
      %26 = sbr.rel (0) target = $region25
    $region24: #{tpu_custom_call.1} parent=1 // pred_region
      _
    $region25: #{tpu_custom_call.1} parent=1 // pred_fallthru
      _
    // Predicated region
    $region26: #{tpu_custom_call.1} parent=1 // pred_check
      _
    $region27: #{tpu_custom_call.1} parent=1 // pred_check_branch
      %28 = sbr.rel (0) target = $region29
    $region28: #{tpu_custom_call.1} parent=1 // pred_region
      _
    $region29: #{tpu_custom_call.1} parent=1 // pred_fallthru
      _
    %v29 = vld [vmem:[%s0] sm:$0xff]
    %v30 = vld [vmem:[%s0 + $0x8] sm:$0xff]
    %v31 = vld [vmem:[%s0 + $0x10] sm:$0xff]
    %v32 = vld [vmem:[%s0 + $0x18] sm:$0xff]
    %v33 = vld [vmem:[%s0 + $0x20] sm:$0xff]
    %v34 = vld [vmem:[%s0 + $0x28] sm:$0xff]
    %v35 = vld [vmem:[%s0 + $0x30] sm:$0xff]
    %v36 = vld [vmem:[%s0 + $0x38] sm:$0xff]
    %v37 = vld [vmem:[%s0 + $0x40] sm:$0xff]
    %v38 = vld [vmem:[%s0 + $0x48] sm:$0xff]
    %v39 = vld [vmem:[%s0 + $0x50] sm:$0xff]
    %v40 = vld [vmem:[%s0 + $0x58] sm:$0xff]
    %v41 = vld [vmem:[%s0 + $0x60] sm:$0xff]
    %v42 = vld [vmem:[%s0 + $0x68] sm:$0xff]
    %v43 = vld [vmem:[%s0 + $0x70] sm:$0xff]
    %v44 = vld [vmem:[%s0 + $0x78] sm:$0xff]
    %v45 = vld [vmem:[%s0 + $0x80] sm:$0xff]
    %v46 = vld [vmem:[%s0 + $0x88] sm:$0xff]
    %v47 = vld [vmem:[%s0 + $0x90] sm:$0xff]
    %v48 = vld [vmem:[%s0 + $0x98] sm:$0xff]
    %v49 = vld [vmem:[%s0 + $0xa0] sm:$0xff]
    %v50 = vld [vmem:[%s0 + $0xa8] sm:$0xff]
    %v51 = vld [vmem:[%s0 + $0xb0] sm:$0xff]
    %v52 = vld [vmem:[%s0 + $0xb8] sm:$0xff]
    %v53 = vld [vmem:[%s0 + $0xc0] sm:$0xff]
    %v54 = vld [vmem:[%s0 + $0xc8] sm:$0xff]
    %v55 = vld [vmem:[%s0 + $0xd0] sm:$0xff]
    %v56 = vld [vmem:[%s0 + $0xd8] sm:$0xff]
    %v57 = vld [vmem:[%s0 + $0xe0] sm:$0xff]
    %v58 = vld [vmem:[%s0 + $0xe8] sm:$0xff]
    %v59 = vld [vmem:[%s0 + $0xf0] sm:$0xff]
    %v60 = vld [vmem:[%s0 + $0xf8] sm:$0xff]
    %v61 = vld [vmem:[%s1] sm:$0x3f]
    %v62 = vld [vmem:[%s2] sm:$0x1]
    %64 = vset.pattern.permute.xlu0 0
    %65 = vperm.xlu0 %64, %v29
    %v66 = vpop.permute.xlu0 %65
    %69 = vset.pattern.permute.xlu0 0
    %70 = vperm.xlu0 %69, %v30
    %v71 = vpop.permute.xlu0 %70
    %74 = vset.pattern.permute.xlu0 0
    %75 = vperm.xlu0 %74, %v31
    %v76 = vpop.permute.xlu0 %75
    %79 = vset.pattern.permute.xlu0 0
    %80 = vperm.xlu0 %79, %v32
    %v81 = vpop.permute.xlu0 %80
    %84 = vset.pattern.permute.xlu0 0
    %85 = vperm.xlu0 %84, %v33
    %v86 = vpop.permute.xlu0 %85
    %89 = vset.pattern.permute.xlu0 0
    %90 = vperm.xlu0 %89, %v34
    %v91 = vpop.permute.xlu0 %90
    %94 = vset.pattern.permute.xlu0 0
    %95 = vperm.xlu0 %94, %v35
    %v96 = vpop.permute.xlu0 %95
    %99 = vset.pattern.permute.xlu0 0
    %100 = vperm.xlu0 %99, %v36
    %v101 = vpop.permute.xlu0 %100
    %104 = vset.pattern.permute.xlu0 0
    %105 = vperm.xlu0 %104, %v37
    %v106 = vpop.permute.xlu0 %105
    %109 = vset.pattern.permute.xlu0 0
    %110 = vperm.xlu0 %109, %v38
    %v111 = vpop.permute.xlu0 %110
    %114 = vset.pattern.permute.xlu0 0
    %115 = vperm.xlu0 %114, %v39
    %v116 = vpop.permute.xlu0 %115
    %119 = vset.pattern.permute.xlu0 0
    %120 = vperm.xlu0 %119, %v40
    %v121 = vpop.permute.xlu0 %120
    %124 = vset.pattern.permute.xlu0 0
    %125 = vperm.xlu0 %124, %v41
    %v126 = vpop.permute.xlu0 %125
    %129 = vset.pattern.permute.xlu0 0
    %130 = vperm.xlu0 %129, %v42
    %v131 = vpop.permute.xlu0 %130
    %134 = vset.pattern.permute.xlu0 0
    %135 = vperm.xlu0 %134, %v43
    %v136 = vpop.permute.xlu0 %135
    %139 = vset.pattern.permute.xlu0 0
    %140 = vperm.xlu0 %139, %v44
    %v141 = vpop.permute.xlu0 %140
    %144 = vset.pattern.permute.xlu0 0
    %145 = vperm.xlu0 %144, %v45
    %v146 = vpop.permute.xlu0 %145
    %149 = vset.pattern.permute.xlu0 0
    %150 = vperm.xlu0 %149, %v46
    %v151 = vpop.permute.xlu0 %150
    %154 = vset.pattern.permute.xlu0 0
    %155 = vperm.xlu0 %154, %v47
    %v156 = vpop.permute.xlu0 %155
    %159 = vset.pattern.permute.xlu0 0
    %160 = vperm.xlu0 %159, %v48
    %v161 = vpop.permute.xlu0 %160
    %164 = vset.pattern.permute.xlu0 0
    %165 = vperm.xlu0 %164, %v49
    %v166 = vpop.permute.xlu0 %165
    %169 = vset.pattern.permute.xlu0 0
    %170 = vperm.xlu0 %169, %v50
    %v171 = vpop.permute.xlu0 %170
    %174 = vset.pattern.permute.xlu0 0
    %175 = vperm.xlu0 %174, %v51
    %v176 = vpop.permute.xlu0 %175
    %179 = vset.pattern.permute.xlu0 0
    %180 = vperm.xlu0 %179, %v52
    %v181 = vpop.permute.xlu0 %180
    %184 = vset.pattern.permute.xlu0 0
    %185 = vperm.xlu0 %184, %v53
    %v186 = vpop.permute.xlu0 %185
    %189 = vset.pattern.permute.xlu0 0
    %190 = vperm.xlu0 %189, %v54
    %v191 = vpop.permute.xlu0 %190
    %194 = vset.pattern.permute.xlu0 0
    %195 = vperm.xlu0 %194, %v55
    %v196 = vpop.permute.xlu0 %195
    %199 = vset.pattern.permute.xlu0 0
    %200 = vperm.xlu0 %199, %v56
    %v201 = vpop.permute.xlu0 %200
    %204 = vset.pattern.permute.xlu0 0
    %205 = vperm.xlu0 %204, %v57
    %v206 = vpop.permute.xlu0 %205
    %209 = vset.pattern.permute.xlu0 0
    %210 = vperm.xlu0 %209, %v58
    %v211 = vpop.permute.xlu0 %210
    %214 = vset.pattern.permute.xlu0 0
    %215 = vperm.xlu0 %214, %v59
    %v216 = vpop.permute.xlu0 %215
    %219 = vset.pattern.permute.xlu0 0
    %220 = vperm.xlu0 %219, %v60
    %v221 = vpop.permute.xlu0 %220
    %v223 = vperm.slane %v61, 0
    %v224 = vmul.f32 %v66, %v223
    %v225 = vmul.f32 %v71, %v223
    %v226 = vmul.f32 %v76, %v223
    %v227 = vmul.f32 %v81, %v223
    %v228 = vmul.f32 %v86, %v223
    %v229 = vmul.f32 %v91, %v223
    %v230 = vmul.f32 %v96, %v223
    %v231 = vmul.f32 %v101, %v223
    %v232 = vmul.f32 %v106, %v223
    %v233 = vmul.f32 %v111, %v223
    %v234 = vmul.f32 %v116, %v223
    %v235 = vmul.f32 %v121, %v223
    %v236 = vmul.f32 %v126, %v223
    %v237 = vmul.f32 %v131, %v223
    %v238 = vmul.f32 %v136, %v223
    %v239 = vmul.f32 %v141, %v223
    %v240 = vmul.f32 %v146, %v223
    %v241 = vmul.f32 %v151, %v223
    %v242 = vmul.f32 %v156, %v223
    %v243 = vmul.f32 %v161, %v223
    %v244 = vmul.f32 %v166, %v223
    %v245 = vmul.f32 %v171, %v223
    %v246 = vmul.f32 %v176, %v223
    %v247 = vmul.f32 %v181, %v223
    %v248 = vmul.f32 %v186, %v223
    %v249 = vmul.f32 %v191, %v223
    %v250 = vmul.f32 %v196, %v223
    %v251 = vmul.f32 %v201, %v223
    %v252 = vmul.f32 %v206, %v223
    %v253 = vmul.f32 %v211, %v223
    %v254 = vmul.f32 %v216, %v223
    %v255 = vmul.f32 %v221, %v223
    %v257 = vperm.slane %v62, 0
    %v259 = vadd.f32 %v257, %v224
    %v260 = vadd.f32 %v257, %v225
    %v261 = vadd.f32 %v257, %v226
    %v262 = vadd.f32 %v257, %v227
    %v263 = vadd.f32 %v257, %v228
    %v264 = vadd.f32 %v257, %v229
    %v265 = vadd.f32 %v257, %v230
    %v266 = vadd.f32 %v257, %v231
    %v267 = vadd.f32 %v257, %v232
    %v268 = vadd.f32 %v257, %v233
    %v269 = vadd.f32 %v257, %v234
    %v270 = vadd.f32 %v257, %v235
    %v271 = vadd.f32 %v257, %v236
    %v272 = vadd.f32 %v257, %v237
    %v273 = vadd.f32 %v257, %v238
    %v274 = vadd.f32 %v257, %v239
    %v275 = vadd.f32 %v257, %v240
    %v276 = vadd.f32 %v257, %v241
    %v277 = vadd.f32 %v257, %v242
    %v278 = vadd.f32 %v257, %v243
    %v279 = vadd.f32 %v257, %v244
    %v280 = vadd.f32 %v257, %v245
    %v281 = vadd.f32 %v257, %v246
    %v282 = vadd.f32 %v257, %v247
    %v283 = vadd.f32 %v257, %v248
    %v284 = vadd.f32 %v257, %v249
    %v285 = vadd.f32 %v257, %v250
    %v286 = vadd.f32 %v257, %v251
    %v287 = vadd.f32 %v257, %v252
    %v288 = vadd.f32 %v257, %v253
    %v289 = vadd.f32 %v257, %v254
    %v290 = vadd.f32 %v257, %v255
    %291 = vset.pattern.permute.xlu0 1
    %292 = vperm.xlu0 %291, %v29
    %v293 = vpop.permute.xlu0 %292
    %295 = vset.pattern.permute.xlu0 1
    %296 = vperm.xlu0 %295, %v30
    %v297 = vpop.permute.xlu0 %296
    %299 = vset.pattern.permute.xlu0 1
    %300 = vperm.xlu0 %299, %v31
    %v301 = vpop.permute.xlu0 %300
    %303 = vset.pattern.permute.xlu0 1
    %304 = vperm.xlu0 %303, %v32
    %v305 = vpop.permute.xlu0 %304
    %307 = vset.pattern.permute.xlu0 1
    %308 = vperm.xlu0 %307, %v33
    %v309 = vpop.permute.xlu0 %308
    %311 = vset.pattern.permute.xlu0 1
    %312 = vperm.xlu0 %311, %v34
    %v313 = vpop.permute.xlu0 %312
    %315 = vset.pattern.permute.xlu0 1
    %316 = vperm.xlu0 %315, %v35
    %v317 = vpop.permute.xlu0 %316
    %319 = vset.pattern.permute.xlu0 1
    %320 = vperm.xlu0 %319, %v36
    %v321 = vpop.permute.xlu0 %320
    %323 = vset.pattern.permute.xlu0 1
    %324 = vperm.xlu0 %323, %v37
    %v325 = vpop.permute.xlu0 %324
    %327 = vset.pattern.permute.xlu0 1
    %328 = vperm.xlu0 %327, %v38
    %v329 = vpop.permute.xlu0 %328
    %331 = vset.pattern.permute.xlu0 1
    %332 = vperm.xlu0 %331, %v39
    %v333 = vpop.permute.xlu0 %332
    %335 = vset.pattern.permute.xlu0 1
    %336 = vperm.xlu0 %335, %v40
    %v337 = vpop.permute.xlu0 %336
    %339 = vset.pattern.permute.xlu0 1
    %340 = vperm.xlu0 %339, %v41
    %v341 = vpop.permute.xlu0 %340
    %343 = vset.pattern.permute.xlu0 1
    %344 = vperm.xlu0 %343, %v42
    %v345 = vpop.permute.xlu0 %344
    %347 = vset.pattern.permute.xlu0 1
    %348 = vperm.xlu0 %347, %v43
    %v349 = vpop.permute.xlu0 %348
    %351 = vset.pattern.permute.xlu0 1
    %352 = vperm.xlu0 %351, %v44
    %v353 = vpop.permute.xlu0 %352
    %355 = vset.pattern.permute.xlu0 1
    %356 = vperm.xlu0 %355, %v45
    %v357 = vpop.permute.xlu0 %356
    %359 = vset.pattern.permute.xlu0 1
    %360 = vperm.xlu0 %359, %v46
    %v361 = vpop.permute.xlu0 %360
    %363 = vset.pattern.permute.xlu0 1
    %364 = vperm.xlu0 %363, %v47
    %v365 = vpop.permute.xlu0 %364
    %367 = vset.pattern.permute.xlu0 1
    %368 = vperm.xlu0 %367, %v48
    %v369 = vpop.permute.xlu0 %368
    %371 = vset.pattern.permute.xlu0 1
    %372 = vperm.xlu0 %371, %v49
    %v373 = vpop.permute.xlu0 %372
    %375 = vset.pattern.permute.xlu0 1
    %376 = vperm.xlu0 %375, %v50
    %v377 = vpop.permute.xlu0 %376
    %379 = vset.pattern.permute.xlu0 1
    %380 = vperm.xlu0 %379, %v51
    %v381 = vpop.permute.xlu0 %380
    %383 = vset.pattern.permute.xlu0 1
    %384 = vperm.xlu0 %383, %v52
    %v385 = vpop.permute.xlu0 %384
    %387 = vset.pattern.permute.xlu0 1
    %388 = vperm.xlu0 %387, %v53
    %v389 = vpop.permute.xlu0 %388
    %391 = vset.pattern.permute.xlu0 1
    %392 = vperm.xlu0 %391, %v54
    %v393 = vpop.permute.xlu0 %392
    %395 = vset.pattern.permute.xlu0 1
    %396 = vperm.xlu0 %395, %v55
    %v397 = vpop.permute.xlu0 %396
    %399 = vset.pattern.permute.xlu0 1
    %400 = vperm.xlu0 %399, %v56
    %v401 = vpop.permute.xlu0 %400
    %403 = vset.pattern.permute.xlu0 1
    %404 = vperm.xlu0 %403, %v57
    %v405 = vpop.permute.xlu0 %404
    %407 = vset.pattern.permute.xlu0 1
    %408 = vperm.xlu0 %407, %v58
    %v409 = vpop.permute.xlu0 %408
    %411 = vset.pattern.permute.xlu0 1
    %412 = vperm.xlu0 %411, %v59
    %v413 = vpop.permute.xlu0 %412
    %415 = vset.pattern.permute.xlu0 1
    %416 = vperm.xlu0 %415, %v60
    %v417 = vpop.permute.xlu0 %416
    %v419 = vperm.slane %v61, 1
    %v420 = vmul.f32 %v293, %v419
    %v421 = vmul.f32 %v297, %v419
    %v422 = vmul.f32 %v301, %v419
    %v423 = vmul.f32 %v305, %v419
    %v424 = vmul.f32 %v309, %v419
    %v425 = vmul.f32 %v313, %v419
    %v426 = vmul.f32 %v317, %v419
    %v427 = vmul.f32 %v321, %v419
    %v428 = vmul.f32 %v325, %v419
    %v429 = vmul.f32 %v329, %v419
    %v430 = vmul.f32 %v333, %v419
    %v431 = vmul.f32 %v337, %v419
    %v432 = vmul.f32 %v341, %v419
    %v433 = vmul.f32 %v345, %v419
    %v434 = vmul.f32 %v349, %v419
    %v435 = vmul.f32 %v353, %v419
    %v436 = vmul.f32 %v357, %v419
    %v437 = vmul.f32 %v361, %v419
    %v438 = vmul.f32 %v365, %v419
    %v439 = vmul.f32 %v369, %v419
    %v440 = vmul.f32 %v373, %v419
    %v441 = vmul.f32 %v377, %v419
    %v442 = vmul.f32 %v381, %v419
    %v443 = vmul.f32 %v385, %v419
    %v444 = vmul.f32 %v389, %v419
    %v445 = vmul.f32 %v393, %v419
    %v446 = vmul.f32 %v397, %v419
    %v447 = vmul.f32 %v401, %v419
    %v448 = vmul.f32 %v405, %v419
    %v449 = vmul.f32 %v409, %v419
    %v450 = vmul.f32 %v413, %v419
    %v451 = vmul.f32 %v417, %v419
    %v452 = vadd.f32 %v259, %v420
    %v453 = vadd.f32 %v260, %v421
    %v454 = vadd.f32 %v261, %v422
    %v455 = vadd.f32 %v262, %v423
    %v456 = vadd.f32 %v263, %v424
    %v457 = vadd.f32 %v264, %v425
    %v458 = vadd.f32 %v265, %v426
    %v459 = vadd.f32 %v266, %v427
    %v460 = vadd.f32 %v267, %v428
    %v461 = vadd.f32 %v268, %v429
    %v462 = vadd.f32 %v269, %v430
    %v463 = vadd.f32 %v270, %v431
    %v464 = vadd.f32 %v271, %v432
    %v465 = vadd.f32 %v272, %v433
    %v466 = vadd.f32 %v273, %v434
    %v467 = vadd.f32 %v274, %v435
    %v468 = vadd.f32 %v275, %v436
    %v469 = vadd.f32 %v276, %v437
    %v470 = vadd.f32 %v277, %v438
    %v471 = vadd.f32 %v278, %v439
    %v472 = vadd.f32 %v279, %v440
    %v473 = vadd.f32 %v280, %v441
    %v474 = vadd.f32 %v281, %v442
    %v475 = vadd.f32 %v282, %v443
    %v476 = vadd.f32 %v283, %v444
    %v477 = vadd.f32 %v284, %v445
    %v478 = vadd.f32 %v285, %v446
    %v479 = vadd.f32 %v286, %v447
    %v480 = vadd.f32 %v287, %v448
    %v481 = vadd.f32 %v288, %v449
    %v482 = vadd.f32 %v289, %v450
    %v483 = vadd.f32 %v290, %v451
    %484 = vset.pattern.permute.xlu0 2
    %485 = vperm.xlu0 %484, %v29
    %v486 = vpop.permute.xlu0 %485
    %488 = vset.pattern.permute.xlu0 2
    %489 = vperm.xlu0 %488, %v30
    %v490 = vpop.permute.xlu0 %489
    %492 = vset.pattern.permute.xlu0 2
    %493 = vperm.xlu0 %492, %v31
    %v494 = vpop.permute.xlu0 %493
    %496 = vset.pattern.permute.xlu0 2
    %497 = vperm.xlu0 %496, %v32
    %v498 = vpop.permute.xlu0 %497
    %500 = vset.pattern.permute.xlu0 2
    %501 = vperm.xlu0 %500, %v33
    %v502 = vpop.permute.xlu0 %501
    %504 = vset.pattern.permute.xlu0 2
    %505 = vperm.xlu0 %504, %v34
    %v506 = vpop.permute.xlu0 %505
    %508 = vset.pattern.permute.xlu0 2
    %509 = vperm.xlu0 %508, %v35
    %v510 = vpop.permute.xlu0 %509
    %512 = vset.pattern.permute.xlu0 2
    %513 = vperm.xlu0 %512, %v36
    %v514 = vpop.permute.xlu0 %513
    %516 = vset.pattern.permute.xlu0 2
    %517 = vperm.xlu0 %516, %v37
    %v518 = vpop.permute.xlu0 %517
    %520 = vset.pattern.permute.xlu0 2
    %521 = vperm.xlu0 %520, %v38
    %v522 = vpop.permute.xlu0 %521
    %524 = vset.pattern.permute.xlu0 2
    %525 = vperm.xlu0 %524, %v39
    %v526 = vpop.permute.xlu0 %525
    %528 = vset.pattern.permute.xlu0 2
    %529 = vperm.xlu0 %528, %v40
    %v530 = vpop.permute.xlu0 %529
    %532 = vset.pattern.permute.xlu0 2
    %533 = vperm.xlu0 %532, %v41
    %v534 = vpop.permute.xlu0 %533
    %536 = vset.pattern.permute.xlu0 2
    %537 = vperm.xlu0 %536, %v42
    %v538 = vpop.permute.xlu0 %537
    %540 = vset.pattern.permute.xlu0 2
    %541 = vperm.xlu0 %540, %v43
    %v542 = vpop.permute.xlu0 %541
    %544 = vset.pattern.permute.xlu0 2
    %545 = vperm.xlu0 %544, %v44
    %v546 = vpop.permute.xlu0 %545
    %548 = vset.pattern.permute.xlu0 2
    %549 = vperm.xlu0 %548, %v45
    %v550 = vpop.permute.xlu0 %549
    %552 = vset.pattern.permute.xlu0 2
    %553 = vperm.xlu0 %552, %v46
    %v554 = vpop.permute.xlu0 %553
    %556 = vset.pattern.permute.xlu0 2
    %557 = vperm.xlu0 %556, %v47
    %v558 = vpop.permute.xlu0 %557
    %560 = vset.pattern.permute.xlu0 2
    %561 = vperm.xlu0 %560, %v48
    %v562 = vpop.permute.xlu0 %561
    %564 = vset.pattern.permute.xlu0 2
    %565 = vperm.xlu0 %564, %v49
    %v566 = vpop.permute.xlu0 %565
    %568 = vset.pattern.permute.xlu0 2
    %569 = vperm.xlu0 %568, %v50
    %v570 = vpop.permute.xlu0 %569
    %572 = vset.pattern.permute.xlu0 2
    %573 = vperm.xlu0 %572, %v51
    %v574 = vpop.permute.xlu0 %573
    %576 = vset.pattern.permute.xlu0 2
    %577 = vperm.xlu0 %576, %v52
    %v578 = vpop.permute.xlu0 %577
    %580 = vset.pattern.permute.xlu0 2
    %581 = vperm.xlu0 %580, %v53
    %v582 = vpop.permute.xlu0 %581
    %584 = vset.pattern.permute.xlu0 2
    %585 = vperm.xlu0 %584, %v54
    %v586 = vpop.permute.xlu0 %585
    %588 = vset.pattern.permute.xlu0 2
    %589 = vperm.xlu0 %588, %v55
    %v590 = vpop.permute.xlu0 %589
    %592 = vset.pattern.permute.xlu0 2
    %593 = vperm.xlu0 %592, %v56
    %v594 = vpop.permute.xlu0 %593
    %596 = vset.pattern.permute.xlu0 2
    %597 = vperm.xlu0 %596, %v57
    %v598 = vpop.permute.xlu0 %597
    %600 = vset.pattern.permute.xlu0 2
    %601 = vperm.xlu0 %600, %v58
    %v602 = vpop.permute.xlu0 %601
    %604 = vset.pattern.permute.xlu0 2
    %605 = vperm.xlu0 %604, %v59
    %v606 = vpop.permute.xlu0 %605
    %608 = vset.pattern.permute.xlu0 2
    %609 = vperm.xlu0 %608, %v60
    %v610 = vpop.permute.xlu0 %609
    %v612 = vperm.slane %v61, 2
    %v613 = vmul.f32 %v486, %v612
    %v614 = vmul.f32 %v490, %v612
    %v615 = vmul.f32 %v494, %v612
    %v616 = vmul.f32 %v498, %v612
    %v617 = vmul.f32 %v502, %v612
    %v618 = vmul.f32 %v506, %v612
    %v619 = vmul.f32 %v510, %v612
    %v620 = vmul.f32 %v514, %v612
    %v621 = vmul.f32 %v518, %v612
    %v622 = vmul.f32 %v522, %v612
    %v623 = vmul.f32 %v526, %v612
    %v624 = vmul.f32 %v530, %v612
    %v625 = vmul.f32 %v534, %v612
    %v626 = vmul.f32 %v538, %v612
    %v627 = vmul.f32 %v542, %v612
    %v628 = vmul.f32 %v546, %v612
    %v629 = vmul.f32 %v550, %v612
    %v630 = vmul.f32 %v554, %v612
    %v631 = vmul.f32 %v558, %v612
    %v632 = vmul.f32 %v562, %v612
    %v633 = vmul.f32 %v566, %v612
    %v634 = vmul.f32 %v570, %v612
    %v635 = vmul.f32 %v574, %v612
    %v636 = vmul.f32 %v578, %v612
    %v637 = vmul.f32 %v582, %v612
    %v638 = vmul.f32 %v586, %v612
    %v639 = vmul.f32 %v590, %v612
    %v640 = vmul.f32 %v594, %v612
    %v641 = vmul.f32 %v598, %v612
    %v642 = vmul.f32 %v602, %v612
    %v643 = vmul.f32 %v606, %v612
    %v644 = vmul.f32 %v610, %v612
    %v645 = vadd.f32 %v452, %v613
    %v646 = vadd.f32 %v453, %v614
    %v647 = vadd.f32 %v454, %v615
    %v648 = vadd.f32 %v455, %v616
    %v649 = vadd.f32 %v456, %v617
    %v650 = vadd.f32 %v457, %v618
    %v651 = vadd.f32 %v458, %v619
    %v652 = vadd.f32 %v459, %v620
    %v653 = vadd.f32 %v460, %v621
    %v654 = vadd.f32 %v461, %v622
    %v655 = vadd.f32 %v462, %v623
    %v656 = vadd.f32 %v463, %v624
    %v657 = vadd.f32 %v464, %v625
    %v658 = vadd.f32 %v465, %v626
    %v659 = vadd.f32 %v466, %v627
    %v660 = vadd.f32 %v467, %v628
    %v661 = vadd.f32 %v468, %v629
    %v662 = vadd.f32 %v469, %v630
    %v663 = vadd.f32 %v470, %v631
    %v664 = vadd.f32 %v471, %v632
    %v665 = vadd.f32 %v472, %v633
    %v666 = vadd.f32 %v473, %v634
    %v667 = vadd.f32 %v474, %v635
    %v668 = vadd.f32 %v475, %v636
    %v669 = vadd.f32 %v476, %v637
    %v670 = vadd.f32 %v477, %v638
    %v671 = vadd.f32 %v478, %v639
    %v672 = vadd.f32 %v479, %v640
    %v673 = vadd.f32 %v480, %v641
    %v674 = vadd.f32 %v481, %v642
    %v675 = vadd.f32 %v482, %v643
    %v676 = vadd.f32 %v483, %v644
    %677 = vset.pattern.permute.xlu0 3
    %678 = vperm.xlu0 %677, %v29
    %v679 = vpop.permute.xlu0 %678
    %681 = vset.pattern.permute.xlu0 3
    %682 = vperm.xlu0 %681, %v30
    %v683 = vpop.permute.xlu0 %682
    %685 = vset.pattern.permute.xlu0 3
    %686 = vperm.xlu0 %685, %v31
    %v687 = vpop.permute.xlu0 %686
    %689 = vset.pattern.permute.xlu0 3
    %690 = vperm.xlu0 %689, %v32
    %v691 = vpop.permute.xlu0 %690
    %693 = vset.pattern.permute.xlu0 3
    %694 = vperm.xlu0 %693, %v33
    %v695 = vpop.permute.xlu0 %694
    %697 = vset.pattern.permute.xlu0 3
    %698 = vperm.xlu0 %697, %v34
    %v699 = vpop.permute.xlu0 %698
    %701 = vset.pattern.permute.xlu0 3
    %702 = vperm.xlu0 %701, %v35
    %v703 = vpop.permute.xlu0 %702
    %705 = vset.pattern.permute.xlu0 3
    %706 = vperm.xlu0 %705, %v36
    %v707 = vpop.permute.xlu0 %706
    %709 = vset.pattern.permute.xlu0 3
    %710 = vperm.xlu0 %709, %v37
    %v711 = vpop.permute.xlu0 %710
    %713 = vset.pattern.permute.xlu0 3
    %714 = vperm.xlu0 %713, %v38
    %v715 = vpop.permute.xlu0 %714
    %717 = vset.pattern.permute.xlu0 3
    %718 = vperm.xlu0 %717, %v39
    %v719 = vpop.permute.xlu0 %718
    %721 = vset.pattern.permute.xlu0 3
    %722 = vperm.xlu0 %721, %v40
    %v723 = vpop.permute.xlu0 %722
    %725 = vset.pattern.permute.xlu0 3
    %726 = vperm.xlu0 %725, %v41
    %v727 = vpop.permute.xlu0 %726
    %729 = vset.pattern.permute.xlu0 3
    %730 = vperm.xlu0 %729, %v42
    %v731 = vpop.permute.xlu0 %730
    %733 = vset.pattern.permute.xlu0 3
    %734 = vperm.xlu0 %733, %v43
    %v735 = vpop.permute.xlu0 %734
    %737 = vset.pattern.permute.xlu0 3
    %738 = vperm.xlu0 %737, %v44
    %v739 = vpop.permute.xlu0 %738
    %741 = vset.pattern.permute.xlu0 3
    %742 = vperm.xlu0 %741, %v45
    %v743 = vpop.permute.xlu0 %742
    %745 = vset.pattern.permute.xlu0 3
    %746 = vperm.xlu0 %745, %v46
    %v747 = vpop.permute.xlu0 %746
    %749 = vset.pattern.permute.xlu0 3
    %750 = vperm.xlu0 %749, %v47
    %v751 = vpop.permute.xlu0 %750
    %753 = vset.pattern.permute.xlu0 3
    %754 = vperm.xlu0 %753, %v48
    %v755 = vpop.permute.xlu0 %754
    %757 = vset.pattern.permute.xlu0 3
    %758 = vperm.xlu0 %757, %v49
    %v759 = vpop.permute.xlu0 %758
    %761 = vset.pattern.permute.xlu0 3
    %762 = vperm.xlu0 %761, %v50
    %v763 = vpop.permute.xlu0 %762
    %765 = vset.pattern.permute.xlu0 3
    %766 = vperm.xlu0 %765, %v51
    %v767 = vpop.permute.xlu0 %766
    %769 = vset.pattern.permute.xlu0 3
    %770 = vperm.xlu0 %769, %v52
    %v771 = vpop.permute.xlu0 %770
    %773 = vset.pattern.permute.xlu0 3
    %774 = vperm.xlu0 %773, %v53
    %v775 = vpop.permute.xlu0 %774
    %777 = vset.pattern.permute.xlu0 3
    %778 = vperm.xlu0 %777, %v54
    %v779 = vpop.permute.xlu0 %778
    %781 = vset.pattern.permute.xlu0 3
    %782 = vperm.xlu0 %781, %v55
    %v783 = vpop.permute.xlu0 %782
    %785 = vset.pattern.permute.xlu0 3
    %786 = vperm.xlu0 %785, %v56
    %v787 = vpop.permute.xlu0 %786
    %789 = vset.pattern.permute.xlu0 3
    %790 = vperm.xlu0 %789, %v57
    %v791 = vpop.permute.xlu0 %790
    %793 = vset.pattern.permute.xlu0 3
    %794 = vperm.xlu0 %793, %v58
    %v795 = vpop.permute.xlu0 %794
    %797 = vset.pattern.permute.xlu0 3
    %798 = vperm.xlu0 %797, %v59
    %v799 = vpop.permute.xlu0 %798
    %801 = vset.pattern.permute.xlu0 3
    %802 = vperm.xlu0 %801, %v60
    %v803 = vpop.permute.xlu0 %802
    %v805 = vperm.slane %v61, 3
    %v806 = vmul.f32 %v679, %v805
    %v807 = vmul.f32 %v683, %v805
    %v808 = vmul.f32 %v687, %v805
    %v809 = vmul.f32 %v691, %v805
    %v810 = vmul.f32 %v695, %v805
    %v811 = vmul.f32 %v699, %v805
    %v812 = vmul.f32 %v703, %v805
    %v813 = vmul.f32 %v707, %v805
    %v814 = vmul.f32 %v711, %v805
    %v815 = vmul.f32 %v715, %v805
    %v816 = vmul.f32 %v719, %v805
    %v817 = vmul.f32 %v723, %v805
    %v818 = vmul.f32 %v727, %v805
    %v819 = vmul.f32 %v731, %v805
    %v820 = vmul.f32 %v735, %v805
    %v821 = vmul.f32 %v739, %v805
    %v822 = vmul.f32 %v743, %v805
    %v823 = vmul.f32 %v747, %v805
    %v824 = vmul.f32 %v751, %v805
    %v825 = vmul.f32 %v755, %v805
    %v826 = vmul.f32 %v759, %v805
    %v827 = vmul.f32 %v763, %v805
    %v828 = vmul.f32 %v767, %v805
    %v829 = vmul.f32 %v771, %v805
    %v830 = vmul.f32 %v775, %v805
    %v831 = vmul.f32 %v779, %v805
    %v832 = vmul.f32 %v783, %v805
    %v833 = vmul.f32 %v787, %v805
    %v834 = vmul.f32 %v791, %v805
    %v835 = vmul.f32 %v795, %v805
    %v836 = vmul.f32 %v799, %v805
    %v837 = vmul.f32 %v803, %v805
    %v838 = vadd.f32 %v645, %v806
    %v839 = vadd.f32 %v646, %v807
    %v840 = vadd.f32 %v647, %v808
    %v841 = vadd.f32 %v648, %v809
    %v842 = vadd.f32 %v649, %v810
    %v843 = vadd.f32 %v650, %v811
    %v844 = vadd.f32 %v651, %v812
    %v845 = vadd.f32 %v652, %v813
    %v846 = vadd.f32 %v653, %v814
    %v847 = vadd.f32 %v654, %v815
    %v848 = vadd.f32 %v655, %v816
    %v849 = vadd.f32 %v656, %v817
    %v850 = vadd.f32 %v657, %v818
    %v851 = vadd.f32 %v658, %v819
    %v852 = vadd.f32 %v659, %v820
    %v853 = vadd.f32 %v660, %v821
    %v854 = vadd.f32 %v661, %v822
    %v855 = vadd.f32 %v662, %v823
    %v856 = vadd.f32 %v663, %v824
    %v857 = vadd.f32 %v664, %v825
    %v858 = vadd.f32 %v665, %v826
    %v859 = vadd.f32 %v666, %v827
    %v860 = vadd.f32 %v667, %v828
    %v861 = vadd.f32 %v668, %v829
    %v862 = vadd.f32 %v669, %v830
    %v863 = vadd.f32 %v670, %v831
    %v864 = vadd.f32 %v671, %v832
    %v865 = vadd.f32 %v672, %v833
    %v866 = vadd.f32 %v673, %v834
    %v867 = vadd.f32 %v674, %v835
    %v868 = vadd.f32 %v675, %v836
    %v869 = vadd.f32 %v676, %v837
    %870 = vset.pattern.permute.xlu0 4
    %871 = vperm.xlu0 %870, %v29
    %v872 = vpop.permute.xlu0 %871
    %874 = vset.pattern.permute.xlu0 4
    %875 = vperm.xlu0 %874, %v30
    %v876 = vpop.permute.xlu0 %875
    %878 = vset.pattern.permute.xlu0 4
    %879 = vperm.xlu0 %878, %v31
    %v880 = vpop.permute.xlu0 %879
    %882 = vset.pattern.permute.xlu0 4
    %883 = vperm.xlu0 %882, %v32
    %v884 = vpop.permute.xlu0 %883
    %886 = vset.pattern.permute.xlu0 4
    %887 = vperm.xlu0 %886, %v33
    %v888 = vpop.permute.xlu0 %887
    %890 = vset.pattern.permute.xlu0 4
    %891 = vperm.xlu0 %890, %v34
    %v892 = vpop.permute.xlu0 %891
    %894 = vset.pattern.permute.xlu0 4
    %895 = vperm.xlu0 %894, %v35
    %v896 = vpop.permute.xlu0 %895
    %898 = vset.pattern.permute.xlu0 4
    %899 = vperm.xlu0 %898, %v36
    %v900 = vpop.permute.xlu0 %899
    %902 = vset.pattern.permute.xlu0 4
    %903 = vperm.xlu0 %902, %v37
    %v904 = vpop.permute.xlu0 %903
    %906 = vset.pattern.permute.xlu0 4
    %907 = vperm.xlu0 %906, %v38
    %v908 = vpop.permute.xlu0 %907
    %910 = vset.pattern.permute.xlu0 4
    %911 = vperm.xlu0 %910, %v39
    %v912 = vpop.permute.xlu0 %911
    %914 = vset.pattern.permute.xlu0 4
    %915 = vperm.xlu0 %914, %v40
    %v916 = vpop.permute.xlu0 %915
    %918 = vset.pattern.permute.xlu0 4
    %919 = vperm.xlu0 %918, %v41
    %v920 = vpop.permute.xlu0 %919
    %922 = vset.pattern.permute.xlu0 4
    %923 = vperm.xlu0 %922, %v42
    %v924 = vpop.permute.xlu0 %923
    %926 = vset.pattern.permute.xlu0 4
    %927 = vperm.xlu0 %926, %v43
    %v928 = vpop.permute.xlu0 %927
    %930 = vset.pattern.permute.xlu0 4
    %931 = vperm.xlu0 %930, %v44
    %v932 = vpop.permute.xlu0 %931
    %934 = vset.pattern.permute.xlu0 4
    %935 = vperm.xlu0 %934, %v45
    %v936 = vpop.permute.xlu0 %935
    %938 = vset.pattern.permute.xlu0 4
    %939 = vperm.xlu0 %938, %v46
    %v940 = vpop.permute.xlu0 %939
    %942 = vset.pattern.permute.xlu0 4
    %943 = vperm.xlu0 %942, %v47
    %v944 = vpop.permute.xlu0 %943
    %946 = vset.pattern.permute.xlu0 4
    %947 = vperm.xlu0 %946, %v48
    %v948 = vpop.permute.xlu0 %947
    %950 = vset.pattern.permute.xlu0 4
    %951 = vperm.xlu0 %950, %v49
    %v952 = vpop.permute.xlu0 %951
    %954 = vset.pattern.permute.xlu0 4
    %955 = vperm.xlu0 %954, %v50
    %v956 = vpop.permute.xlu0 %955
    %958 = vset.pattern.permute.xlu0 4
    %959 = vperm.xlu0 %958, %v51
    %v960 = vpop.permute.xlu0 %959
    %962 = vset.pattern.permute.xlu0 4
    %963 = vperm.xlu0 %962, %v52
    %v964 = vpop.permute.xlu0 %963
    %966 = vset.pattern.permute.xlu0 4
    %967 = vperm.xlu0 %966, %v53
    %v968 = vpop.permute.xlu0 %967
    %970 = vset.pattern.permute.xlu0 4
    %971 = vperm.xlu0 %970, %v54
    %v972 = vpop.permute.xlu0 %971
    %974 = vset.pattern.permute.xlu0 4
    %975 = vperm.xlu0 %974, %v55
    %v976 = vpop.permute.xlu0 %975
    %978 = vset.pattern.permute.xlu0 4
    %979 = vperm.xlu0 %978, %v56
    %v980 = vpop.permute.xlu0 %979
    %982 = vset.pattern.permute.xlu0 4
    %983 = vperm.xlu0 %982, %v57
    %v984 = vpop.permute.xlu0 %983
    %986 = vset.pattern.permute.xlu0 4
    %987 = vperm.xlu0 %986, %v58
    %v988 = vpop.permute.xlu0 %987
    %990 = vset.pattern.permute.xlu0 4
    %991 = vperm.xlu0 %990, %v59
    %v992 = vpop.permute.xlu0 %991
    %994 = vset.pattern.permute.xlu0 4
    %995 = vperm.xlu0 %994, %v60
    %v996 = vpop.permute.xlu0 %995
    %v998 = vperm.slane %v61, 4
    %v999 = vmul.f32 %v872, %v998
    %v1000 = vmul.f32 %v876, %v998
    %v1001 = vmul.f32 %v880, %v998
    %v1002 = vmul.f32 %v884, %v998
    %v1003 = vmul.f32 %v888, %v998
    %v1004 = vmul.f32 %v892, %v998
    %v1005 = vmul.f32 %v896, %v998
    %v1006 = vmul.f32 %v900, %v998
    %v1007 = vmul.f32 %v904, %v998
    %v1008 = vmul.f32 %v908, %v998
    %v1009 = vmul.f32 %v912, %v998
    %v1010 = vmul.f32 %v916, %v998
    %v1011 = vmul.f32 %v920, %v998
    %v1012 = vmul.f32 %v924, %v998
    %v1013 = vmul.f32 %v928, %v998
    %v1014 = vmul.f32 %v932, %v998
    %v1015 = vmul.f32 %v936, %v998
    %v1016 = vmul.f32 %v940, %v998
    %v1017 = vmul.f32 %v944, %v998
    %v1018 = vmul.f32 %v948, %v998
    %v1019 = vmul.f32 %v952, %v998
    %v1020 = vmul.f32 %v956, %v998
    %v1021 = vmul.f32 %v960, %v998
    %v1022 = vmul.f32 %v964, %v998
    %v1023 = vmul.f32 %v968, %v998
    %v1024 = vmul.f32 %v972, %v998
    %v1025 = vmul.f32 %v976, %v998
    %v1026 = vmul.f32 %v980, %v998
    %v1027 = vmul.f32 %v984, %v998
    %v1028 = vmul.f32 %v988, %v998
    %v1029 = vmul.f32 %v992, %v998
    %v1030 = vmul.f32 %v996, %v998
    %v1031 = vadd.f32 %v838, %v999
    %v1032 = vadd.f32 %v839, %v1000
    %v1033 = vadd.f32 %v840, %v1001
    %v1034 = vadd.f32 %v841, %v1002
    %v1035 = vadd.f32 %v842, %v1003
    %v1036 = vadd.f32 %v843, %v1004
    %v1037 = vadd.f32 %v844, %v1005
    %v1038 = vadd.f32 %v845, %v1006
    %v1039 = vadd.f32 %v846, %v1007
    %v1040 = vadd.f32 %v847, %v1008
    %v1041 = vadd.f32 %v848, %v1009
    %v1042 = vadd.f32 %v849, %v1010
    %v1043 = vadd.f32 %v850, %v1011
    %v1044 = vadd.f32 %v851, %v1012
    %v1045 = vadd.f32 %v852, %v1013
    %v1046 = vadd.f32 %v853, %v1014
    %v1047 = vadd.f32 %v854, %v1015
    %v1048 = vadd.f32 %v855, %v1016
    %v1049 = vadd.f32 %v856, %v1017
    %v1050 = vadd.f32 %v857, %v1018
    %v1051 = vadd.f32 %v858, %v1019
    %v1052 = vadd.f32 %v859, %v1020
    %v1053 = vadd.f32 %v860, %v1021
    %v1054 = vadd.f32 %v861, %v1022
    %v1055 = vadd.f32 %v862, %v1023
    %v1056 = vadd.f32 %v863, %v1024
    %v1057 = vadd.f32 %v864, %v1025
    %v1058 = vadd.f32 %v865, %v1026
    %v1059 = vadd.f32 %v866, %v1027
    %v1060 = vadd.f32 %v867, %v1028
    %v1061 = vadd.f32 %v868, %v1029
    %v1062 = vadd.f32 %v869, %v1030
    %1063 = vset.pattern.permute.xlu0 5
    %1064 = vperm.xlu0 %1063, %v29
    %v1065 = vpop.permute.xlu0 %1064
    %1067 = vset.pattern.permute.xlu0 5
    %1068 = vperm.xlu0 %1067, %v30
    %v1069 = vpop.permute.xlu0 %1068
    %1071 = vset.pattern.permute.xlu0 5
    %1072 = vperm.xlu0 %1071, %v31
    %v1073 = vpop.permute.xlu0 %1072
    %1075 = vset.pattern.permute.xlu0 5
    %1076 = vperm.xlu0 %1075, %v32
    %v1077 = vpop.permute.xlu0 %1076
    %1079 = vset.pattern.permute.xlu0 5
    %1080 = vperm.xlu0 %1079, %v33
    %v1081 = vpop.permute.xlu0 %1080
    %1083 = vset.pattern.permute.xlu0 5
    %1084 = vperm.xlu0 %1083, %v34
    %v1085 = vpop.permute.xlu0 %1084
    %1087 = vset.pattern.permute.xlu0 5
    %1088 = vperm.xlu0 %1087, %v35
    %v1089 = vpop.permute.xlu0 %1088
    %1091 = vset.pattern.permute.xlu0 5
    %1092 = vperm.xlu0 %1091, %v36
    %v1093 = vpop.permute.xlu0 %1092
    %1095 = vset.pattern.permute.xlu0 5
    %1096 = vperm.xlu0 %1095, %v37
    %v1097 = vpop.permute.xlu0 %1096
    %1099 = vset.pattern.permute.xlu0 5
    %1100 = vperm.xlu0 %1099, %v38
    %v1101 = vpop.permute.xlu0 %1100
    %1103 = vset.pattern.permute.xlu0 5
    %1104 = vperm.xlu0 %1103, %v39
    %v1105 = vpop.permute.xlu0 %1104
    %1107 = vset.pattern.permute.xlu0 5
    %1108 = vperm.xlu0 %1107, %v40
    %v1109 = vpop.permute.xlu0 %1108
    %1111 = vset.pattern.permute.xlu0 5
    %1112 = vperm.xlu0 %1111, %v41
    %v1113 = vpop.permute.xlu0 %1112
    %1115 = vset.pattern.permute.xlu0 5
    %1116 = vperm.xlu0 %1115, %v42
    %v1117 = vpop.permute.xlu0 %1116
    %1119 = vset.pattern.permute.xlu0 5
    %1120 = vperm.xlu0 %1119, %v43
    %v1121 = vpop.permute.xlu0 %1120
    %1123 = vset.pattern.permute.xlu0 5
    %1124 = vperm.xlu0 %1123, %v44
    %v1125 = vpop.permute.xlu0 %1124
    %1127 = vset.pattern.permute.xlu0 5
    %1128 = vperm.xlu0 %1127, %v45
    %v1129 = vpop.permute.xlu0 %1128
    %1131 = vset.pattern.permute.xlu0 5
    %1132 = vperm.xlu0 %1131, %v46
    %v1133 = vpop.permute.xlu0 %1132
    %1135 = vset.pattern.permute.xlu0 5
    %1136 = vperm.xlu0 %1135, %v47
    %v1137 = vpop.permute.xlu0 %1136
    %1139 = vset.pattern.permute.xlu0 5
    %1140 = vperm.xlu0 %1139, %v48
    %v1141 = vpop.permute.xlu0 %1140
    %1143 = vset.pattern.permute.xlu0 5
    %1144 = vperm.xlu0 %1143, %v49
    %v1145 = vpop.permute.xlu0 %1144
    %1147 = vset.pattern.permute.xlu0 5
    %1148 = vperm.xlu0 %1147, %v50
    %v1149 = vpop.permute.xlu0 %1148
    %1151 = vset.pattern.permute.xlu0 5
    %1152 = vperm.xlu0 %1151, %v51
    %v1153 = vpop.permute.xlu0 %1152
    %1155 = vset.pattern.permute.xlu0 5
    %1156 = vperm.xlu0 %1155, %v52
    %v1157 = vpop.permute.xlu0 %1156
    %1159 = vset.pattern.permute.xlu0 5
    %1160 = vperm.xlu0 %1159, %v53
    %v1161 = vpop.permute.xlu0 %1160
    %1163 = vset.pattern.permute.xlu0 5
    %1164 = vperm.xlu0 %1163, %v54
    %v1165 = vpop.permute.xlu0 %1164
    %1167 = vset.pattern.permute.xlu0 5
    %1168 = vperm.xlu0 %1167, %v55
    %v1169 = vpop.permute.xlu0 %1168
    %1171 = vset.pattern.permute.xlu0 5
    %1172 = vperm.xlu0 %1171, %v56
    %v1173 = vpop.permute.xlu0 %1172
    %1175 = vset.pattern.permute.xlu0 5
    %1176 = vperm.xlu0 %1175, %v57
    %v1177 = vpop.permute.xlu0 %1176
    %1179 = vset.pattern.permute.xlu0 5
    %1180 = vperm.xlu0 %1179, %v58
    %v1181 = vpop.permute.xlu0 %1180
    %1183 = vset.pattern.permute.xlu0 5
    %1184 = vperm.xlu0 %1183, %v59
    %v1185 = vpop.permute.xlu0 %1184
    %1187 = vset.pattern.permute.xlu0 5
    %1188 = vperm.xlu0 %1187, %v60
    %v1189 = vpop.permute.xlu0 %1188
    %v1191 = vperm.slane %v61, 5
    %v1192 = vmul.f32 %v1065, %v1191
    %v1193 = vmul.f32 %v1069, %v1191
    %v1194 = vmul.f32 %v1073, %v1191
    %v1195 = vmul.f32 %v1077, %v1191
    %v1196 = vmul.f32 %v1081, %v1191
    %v1197 = vmul.f32 %v1085, %v1191
    %v1198 = vmul.f32 %v1089, %v1191
    %v1199 = vmul.f32 %v1093, %v1191
    %v1200 = vmul.f32 %v1097, %v1191
    %v1201 = vmul.f32 %v1101, %v1191
    %v1202 = vmul.f32 %v1105, %v1191
    %v1203 = vmul.f32 %v1109, %v1191
    %v1204 = vmul.f32 %v1113, %v1191
    %v1205 = vmul.f32 %v1117, %v1191
    %v1206 = vmul.f32 %v1121, %v1191
    %v1207 = vmul.f32 %v1125, %v1191
    %v1208 = vmul.f32 %v1129, %v1191
    %v1209 = vmul.f32 %v1133, %v1191
    %v1210 = vmul.f32 %v1137, %v1191
    %v1211 = vmul.f32 %v1141, %v1191
    %v1212 = vmul.f32 %v1145, %v1191
    %v1213 = vmul.f32 %v1149, %v1191
    %v1214 = vmul.f32 %v1153, %v1191
    %v1215 = vmul.f32 %v1157, %v1191
    %v1216 = vmul.f32 %v1161, %v1191
    %v1217 = vmul.f32 %v1165, %v1191
    %v1218 = vmul.f32 %v1169, %v1191
    %v1219 = vmul.f32 %v1173, %v1191
    %v1220 = vmul.f32 %v1177, %v1191
    %v1221 = vmul.f32 %v1181, %v1191
    %v1222 = vmul.f32 %v1185, %v1191
    %v1223 = vmul.f32 %v1189, %v1191
    %v1224 = vadd.f32 %v1031, %v1192
    %v1225 = vadd.f32 %v1032, %v1193
    %v1226 = vadd.f32 %v1033, %v1194
    %v1227 = vadd.f32 %v1034, %v1195
    %v1228 = vadd.f32 %v1035, %v1196
    %v1229 = vadd.f32 %v1036, %v1197
    %v1230 = vadd.f32 %v1037, %v1198
    %v1231 = vadd.f32 %v1038, %v1199
    %v1232 = vadd.f32 %v1039, %v1200
    %v1233 = vadd.f32 %v1040, %v1201
    %v1234 = vadd.f32 %v1041, %v1202
    %v1235 = vadd.f32 %v1042, %v1203
    %v1236 = vadd.f32 %v1043, %v1204
    %v1237 = vadd.f32 %v1044, %v1205
    %v1238 = vadd.f32 %v1045, %v1206
    %v1239 = vadd.f32 %v1046, %v1207
    %v1240 = vadd.f32 %v1047, %v1208
    %v1241 = vadd.f32 %v1048, %v1209
    %v1242 = vadd.f32 %v1049, %v1210
    %v1243 = vadd.f32 %v1050, %v1211
    %v1244 = vadd.f32 %v1051, %v1212
    %v1245 = vadd.f32 %v1052, %v1213
    %v1246 = vadd.f32 %v1053, %v1214
    %v1247 = vadd.f32 %v1054, %v1215
    %v1248 = vadd.f32 %v1055, %v1216
    %v1249 = vadd.f32 %v1056, %v1217
    %v1250 = vadd.f32 %v1057, %v1218
    %v1251 = vadd.f32 %v1058, %v1219
    %v1252 = vadd.f32 %v1059, %v1220
    %v1253 = vadd.f32 %v1060, %v1221
    %v1254 = vadd.f32 %v1061, %v1222
    %v1255 = vadd.f32 %v1062, %v1223
    %v1256 = vmax.f32 %v1224, 0.0
    %v1257 = vmax.f32 %v1225, 0.0
    %v1258 = vmax.f32 %v1226, 0.0
    %v1259 = vmax.f32 %v1227, 0.0
    %v1260 = vmax.f32 %v1228, 0.0
    %v1261 = vmax.f32 %v1229, 0.0
    %v1262 = vmax.f32 %v1230, 0.0
    %v1263 = vmax.f32 %v1231, 0.0
    %v1264 = vmax.f32 %v1232, 0.0
    %v1265 = vmax.f32 %v1233, 0.0
    %v1266 = vmax.f32 %v1234, 0.0
    %v1267 = vmax.f32 %v1235, 0.0
    %v1268 = vmax.f32 %v1236, 0.0
    %v1269 = vmax.f32 %v1237, 0.0
    %v1270 = vmax.f32 %v1238, 0.0
    %v1271 = vmax.f32 %v1239, 0.0
    %v1272 = vmax.f32 %v1240, 0.0
    %v1273 = vmax.f32 %v1241, 0.0
    %v1274 = vmax.f32 %v1242, 0.0
    %v1275 = vmax.f32 %v1243, 0.0
    %v1276 = vmax.f32 %v1244, 0.0
    %v1277 = vmax.f32 %v1245, 0.0
    %v1278 = vmax.f32 %v1246, 0.0
    %v1279 = vmax.f32 %v1247, 0.0
    %v1280 = vmax.f32 %v1248, 0.0
    %v1281 = vmax.f32 %v1249, 0.0
    %v1282 = vmax.f32 %v1250, 0.0
    %v1283 = vmax.f32 %v1251, 0.0
    %v1284 = vmax.f32 %v1252, 0.0
    %v1285 = vmax.f32 %v1253, 0.0
    %v1286 = vmax.f32 %v1254, 0.0
    %v1287 = vmax.f32 %v1255, 0.0
    %v1288 = vld [vmem:[%s3] sm:$0xff]
    %v1289 = vld [vmem:[%s3 + $0x8] sm:$0xff]
    %v1290 = vld [vmem:[%s3 + $0x10] sm:$0xff]
    %v1291 = vld [vmem:[%s3 + $0x18] sm:$0xff]
    %v1292 = vld [vmem:[%s4] sm:$0x1]
    %v1294 = vperm.slane %v1292, 0
    %vm1296 = vcmask 261120
    %v1298 = vsel %vm1296, %v1256, 0
    %v1301 = vsel %vm1296, %v1257, 0
    %v1304 = vsel %vm1296, %v1258, 0
    %v1307 = vsel %vm1296, %v1259, 0
    %v1310 = vsel %vm1296, %v1260, 0
    %v1313 = vsel %vm1296, %v1261, 0
    %v1316 = vsel %vm1296, %v1262, 0
    %v1319 = vsel %vm1296, %v1263, 0
    %v1322 = vsel %vm1296, %v1264, 0
    %v1325 = vsel %vm1296, %v1265, 0
    %v1328 = vsel %vm1296, %v1266, 0
    %v1331 = vsel %vm1296, %v1267, 0
    %v1334 = vsel %vm1296, %v1268, 0
    %v1337 = vsel %vm1296, %v1269, 0
    %v1340 = vsel %vm1296, %v1270, 0
    %v1343 = vsel %vm1296, %v1271, 0
    %v1346 = vsel %vm1296, %v1272, 0
    %v1349 = vsel %vm1296, %v1273, 0
    %v1352 = vsel %vm1296, %v1274, 0
    %v1355 = vsel %vm1296, %v1275, 0
    %v1358 = vsel %vm1296, %v1276, 0
    %v1361 = vsel %vm1296, %v1277, 0
    %v1364 = vsel %vm1296, %v1278, 0
    %v1367 = vsel %vm1296, %v1279, 0
    %v1370 = vsel %vm1296, %v1280, 0
    %v1373 = vsel %vm1296, %v1281, 0
    %v1376 = vsel %vm1296, %v1282, 0
    %v1379 = vsel %vm1296, %v1283, 0
    %v1382 = vsel %vm1296, %v1284, 0
    %v1385 = vsel %vm1296, %v1285, 0
    %v1388 = vsel %vm1296, %v1286, 0
    %v1391 = vsel %vm1296, %v1287, 0
    %1393 = vmatpush.msra.mxu0 0.0
    %1394 = vmatpush.msra.mxu0 0.0
    %1395 = vmatpush.msra.mxu0 0.0
    %1396 = vmatpush.msra.mxu0 0.0
    %1397 = vmatpush.msra.mxu0 0.0
    %1398 = vmatpush.msra.mxu0 0.0
    %1399 = vmatpush.msra.mxu0 0.0
    %1400 = vmatpush.msra.mxu0 0.0
    %1401 = vmatpush.msra.mxu0 0.0
    %1402 = vmatpush.msra.mxu0 0.0
    %1403 = vmatpush.msra.mxu0 0.0
    %1404 = vmatpush.msra.mxu0 0.0
    %1405 = vmatpush.msra.mxu0 %v1291
    %1406 = vmatpush.msra.mxu0 %v1290
    %1407 = vmatpush.msra.mxu0 %v1289
    %1408 = vmatpush.msra.mxu0 %v1288
    %1409 = vmatmul.f32.gmra.mxu0 %v1298
    %v1410 = vpop.f32.mrf.mxu0
    %v1411 = vadd.f32 %v1294, %v1410
    %1412 = vmatmul.f32.gmra.mxu0 %v1301
    %v1413 = vpop.f32.mrf.mxu0
    %v1414 = vadd.f32 %v1294, %v1413
    %1415 = vmatmul.f32.gmra.mxu0 %v1304
    %v1416 = vpop.f32.mrf.mxu0
    %v1417 = vadd.f32 %v1294, %v1416
    %1418 = vmatmul.f32.gmra.mxu0 %v1307
    %v1419 = vpop.f32.mrf.mxu0
    %v1420 = vadd.f32 %v1294, %v1419
    %1421 = vmatmul.f32.gmra.mxu0 %v1310
    %v1422 = vpop.f32.mrf.mxu0
    %v1423 = vadd.f32 %v1294, %v1422
    %1424 = vmatmul.f32.gmra.mxu0 %v1313
    %v1425 = vpop.f32.mrf.mxu0
    %v1426 = vadd.f32 %v1294, %v1425
    %1427 = vmatmul.f32.gmra.mxu0 %v1316
    %v1428 = vpop.f32.mrf.mxu0
    %v1429 = vadd.f32 %v1294, %v1428
    %1430 = vmatmul.f32.gmra.mxu0 %v1319
    %v1431 = vpop.f32.mrf.mxu0
    %v1432 = vadd.f32 %v1294, %v1431
    %1433 = vmatmul.f32.gmra.mxu0 %v1322
    %v1434 = vpop.f32.mrf.mxu0
    %v1435 = vadd.f32 %v1294, %v1434
    %1436 = vmatmul.f32.gmra.mxu0 %v1325
    %v1437 = vpop.f32.mrf.mxu0
    %v1438 = vadd.f32 %v1294, %v1437
    %1439 = vmatmul.f32.gmra.mxu0 %v1328
    %v1440 = vpop.f32.mrf.mxu0
    %v1441 = vadd.f32 %v1294, %v1440
    %1442 = vmatmul.f32.gmra.mxu0 %v1331
    %v1443 = vpop.f32.mrf.mxu0
    %v1444 = vadd.f32 %v1294, %v1443
    %1445 = vmatmul.f32.gmra.mxu0 %v1334
    %v1446 = vpop.f32.mrf.mxu0
    %v1447 = vadd.f32 %v1294, %v1446
    %1448 = vmatmul.f32.gmra.mxu0 %v1337
    %v1449 = vpop.f32.mrf.mxu0
    %v1450 = vadd.f32 %v1294, %v1449
    %1451 = vmatmul.f32.gmra.mxu0 %v1340
    %v1452 = vpop.f32.mrf.mxu0
    %v1453 = vadd.f32 %v1294, %v1452
    %1454 = vmatmul.f32.gmra.mxu0 %v1343
    %v1455 = vpop.f32.mrf.mxu0
    %v1456 = vadd.f32 %v1294, %v1455
    %1457 = vmatmul.f32.gmra.mxu0 %v1346
    %v1458 = vpop.f32.mrf.mxu0
    %v1459 = vadd.f32 %v1294, %v1458
    %1460 = vmatmul.f32.gmra.mxu0 %v1349
    %v1461 = vpop.f32.mrf.mxu0
    %v1462 = vadd.f32 %v1294, %v1461
    %1463 = vmatmul.f32.gmra.mxu0 %v1352
    %v1464 = vpop.f32.mrf.mxu0
    %v1465 = vadd.f32 %v1294, %v1464
    %1466 = vmatmul.f32.gmra.mxu0 %v1355
    %v1467 = vpop.f32.mrf.mxu0
    %v1468 = vadd.f32 %v1294, %v1467
    %1469 = vmatmul.f32.gmra.mxu0 %v1358
    %v1470 = vpop.f32.mrf.mxu0
    %v1471 = vadd.f32 %v1294, %v1470
    %1472 = vmatmul.f32.gmra.mxu0 %v1361
    %v1473 = vpop.f32.mrf.mxu0
    %v1474 = vadd.f32 %v1294, %v1473
    %1475 = vmatmul.f32.gmra.mxu0 %v1364
    %v1476 = vpop.f32.mrf.mxu0
    %v1477 = vadd.f32 %v1294, %v1476
    %1478 = vmatmul.f32.gmra.mxu0 %v1367
    %v1479 = vpop.f32.mrf.mxu0
    %v1480 = vadd.f32 %v1294, %v1479
    %1481 = vmatmul.f32.gmra.mxu0 %v1370
    %v1482 = vpop.f32.mrf.mxu0
    %v1483 = vadd.f32 %v1294, %v1482
    %1484 = vmatmul.f32.gmra.mxu0 %v1373
    %v1485 = vpop.f32.mrf.mxu0
    %v1486 = vadd.f32 %v1294, %v1485
    %1487 = vmatmul.f32.gmra.mxu0 %v1376
    %v1488 = vpop.f32.mrf.mxu0
    %v1489 = vadd.f32 %v1294, %v1488
    %1490 = vmatmul.f32.gmra.mxu0 %v1379
    %v1491 = vpop.f32.mrf.mxu0
    %v1492 = vadd.f32 %v1294, %v1491
    %1493 = vmatmul.f32.gmra.mxu0 %v1382
    %v1494 = vpop.f32.mrf.mxu0
    %v1495 = vadd.f32 %v1294, %v1494
    %1496 = vmatmul.f32.gmra.mxu0 %v1385
    %v1497 = vpop.f32.mrf.mxu0
    %v1498 = vadd.f32 %v1294, %v1497
    %1499 = vmatmul.f32.gmra.mxu0 %v1388
    %v1500 = vpop.f32.mrf.mxu0
    %v1501 = vadd.f32 %v1294, %v1500
    %1502 = vmatmul.f32.gmra.mxu0 %v1391
    %v1503 = vpop.f32.mrf.mxu0
    %v1504 = vadd.f32 %v1294, %v1503
    %1505 = vdwg.mxu0
    %v1506 = vmax.f32 %v1411, 0.0
    %v1507 = vmax.f32 %v1414, 0.0
    %v1508 = vmax.f32 %v1417, 0.0
    %v1509 = vmax.f32 %v1420, 0.0
    %v1510 = vmax.f32 %v1423, 0.0
    %v1511 = vmax.f32 %v1426, 0.0
    %v1512 = vmax.f32 %v1429, 0.0
    %v1513 = vmax.f32 %v1432, 0.0
    %v1514 = vmax.f32 %v1435, 0.0
    %v1515 = vmax.f32 %v1438, 0.0
    %v1516 = vmax.f32 %v1441, 0.0
    %v1517 = vmax.f32 %v1444, 0.0
    %v1518 = vmax.f32 %v1447, 0.0
    %v1519 = vmax.f32 %v1450, 0.0
    %v1520 = vmax.f32 %v1453, 0.0
    %v1521 = vmax.f32 %v1456, 0.0
    %v1522 = vmax.f32 %v1459, 0.0
    %v1523 = vmax.f32 %v1462, 0.0
    %v1524 = vmax.f32 %v1465, 0.0
    %v1525 = vmax.f32 %v1468, 0.0
    %v1526 = vmax.f32 %v1471, 0.0
    %v1527 = vmax.f32 %v1474, 0.0
    %v1528 = vmax.f32 %v1477, 0.0
    %v1529 = vmax.f32 %v1480, 0.0
    %v1530 = vmax.f32 %v1483, 0.0
    %v1531 = vmax.f32 %v1486, 0.0
    %v1532 = vmax.f32 %v1489, 0.0
    %v1533 = vmax.f32 %v1492, 0.0
    %v1534 = vmax.f32 %v1495, 0.0
    %v1535 = vmax.f32 %v1498, 0.0
    %v1536 = vmax.f32 %v1501, 0.0
    %v1537 = vmax.f32 %v1504, 0.0
    %v1538 = vld [vmem:[%s5] sm:$0x1]
    %v1540 = vperm.slane %v1538, 0
    %v1542 = vmul.f32 %v1506, %v1540
    %v1543 = vmul.f32 %v1507, %v1540
    %v1544 = vmul.f32 %v1508, %v1540
    %v1545 = vmul.f32 %v1509, %v1540
    %v1546 = vmul.f32 %v1510, %v1540
    %v1547 = vmul.f32 %v1511, %v1540
    %v1548 = vmul.f32 %v1512, %v1540
    %v1549 = vmul.f32 %v1513, %v1540
    %v1550 = vmul.f32 %v1514, %v1540
    %v1551 = vmul.f32 %v1515, %v1540
    %v1552 = vmul.f32 %v1516, %v1540
    %v1553 = vmul.f32 %v1517, %v1540
    %v1554 = vmul.f32 %v1518, %v1540
    %v1555 = vmul.f32 %v1519, %v1540
    %v1556 = vmul.f32 %v1520, %v1540
    %v1557 = vmul.f32 %v1521, %v1540
    %v1558 = vmul.f32 %v1522, %v1540
    %v1559 = vmul.f32 %v1523, %v1540
    %v1560 = vmul.f32 %v1524, %v1540
    %v1561 = vmul.f32 %v1525, %v1540
    %v1562 = vmul.f32 %v1526, %v1540
    %v1563 = vmul.f32 %v1527, %v1540
    %v1564 = vmul.f32 %v1528, %v1540
    %v1565 = vmul.f32 %v1529, %v1540
    %v1566 = vmul.f32 %v1530, %v1540
    %v1567 = vmul.f32 %v1531, %v1540
    %v1568 = vmul.f32 %v1532, %v1540
    %v1569 = vmul.f32 %v1533, %v1540
    %v1570 = vmul.f32 %v1534, %v1540
    %v1571 = vmul.f32 %v1535, %v1540
    %v1572 = vmul.f32 %v1536, %v1540
    %v1573 = vmul.f32 %v1537, %v1540
    %v1574 = vsel %vm1296, %v1542, 0.0
    %1575 = vadd.xlane.f32.xlu0 %v1574
    %v1576 = vpop.xlane.xlu0 %1575
    %v1577 = vsel %vm1296, %v1543, 0.0
    %1578 = vadd.xlane.f32.xlu0 %v1577
    %v1579 = vpop.xlane.xlu0 %1578
    %v1580 = vsel %vm1296, %v1544, 0.0
    %1581 = vadd.xlane.f32.xlu0 %v1580
    %v1582 = vpop.xlane.xlu0 %1581
    %v1583 = vsel %vm1296, %v1545, 0.0
    %1584 = vadd.xlane.f32.xlu0 %v1583
    %v1585 = vpop.xlane.xlu0 %1584
    %v1586 = vsel %vm1296, %v1546, 0.0
    %1587 = vadd.xlane.f32.xlu0 %v1586
    %v1588 = vpop.xlane.xlu0 %1587
    %v1589 = vsel %vm1296, %v1547, 0.0
    %1590 = vadd.xlane.f32.xlu0 %v1589
    %v1591 = vpop.xlane.xlu0 %1590
    %v1592 = vsel %vm1296, %v1548, 0.0
    %1593 = vadd.xlane.f32.xlu0 %v1592
    %v1594 = vpop.xlane.xlu0 %1593
    %v1595 = vsel %vm1296, %v1549, 0.0
    %1596 = vadd.xlane.f32.xlu0 %v1595
    %v1597 = vpop.xlane.xlu0 %1596
    %v1598 = vsel %vm1296, %v1550, 0.0
    %1599 = vadd.xlane.f32.xlu0 %v1598
    %v1600 = vpop.xlane.xlu0 %1599
    %v1601 = vsel %vm1296, %v1551, 0.0
    %1602 = vadd.xlane.f32.xlu0 %v1601
    %v1603 = vpop.xlane.xlu0 %1602
    %v1604 = vsel %vm1296, %v1552, 0.0
    %1605 = vadd.xlane.f32.xlu0 %v1604
    %v1606 = vpop.xlane.xlu0 %1605
    %v1607 = vsel %vm1296, %v1553, 0.0
    %1608 = vadd.xlane.f32.xlu0 %v1607
    %v1609 = vpop.xlane.xlu0 %1608
    %v1610 = vsel %vm1296, %v1554, 0.0
    %1611 = vadd.xlane.f32.xlu0 %v1610
    %v1612 = vpop.xlane.xlu0 %1611
    %v1613 = vsel %vm1296, %v1555, 0.0
    %1614 = vadd.xlane.f32.xlu0 %v1613
    %v1615 = vpop.xlane.xlu0 %1614
    %v1616 = vsel %vm1296, %v1556, 0.0
    %1617 = vadd.xlane.f32.xlu0 %v1616
    %v1618 = vpop.xlane.xlu0 %1617
    %v1619 = vsel %vm1296, %v1557, 0.0
    %1620 = vadd.xlane.f32.xlu0 %v1619
    %v1621 = vpop.xlane.xlu0 %1620
    %v1622 = vsel %vm1296, %v1558, 0.0
    %1623 = vadd.xlane.f32.xlu0 %v1622
    %v1624 = vpop.xlane.xlu0 %1623
    %v1625 = vsel %vm1296, %v1559, 0.0
    %1626 = vadd.xlane.f32.xlu0 %v1625
    %v1627 = vpop.xlane.xlu0 %1626
    %v1628 = vsel %vm1296, %v1560, 0.0
    %1629 = vadd.xlane.f32.xlu0 %v1628
    %v1630 = vpop.xlane.xlu0 %1629
    %v1631 = vsel %vm1296, %v1561, 0.0
    %1632 = vadd.xlane.f32.xlu0 %v1631
    %v1633 = vpop.xlane.xlu0 %1632
    %v1634 = vsel %vm1296, %v1562, 0.0
    %1635 = vadd.xlane.f32.xlu0 %v1634
    %v1636 = vpop.xlane.xlu0 %1635
    %v1637 = vsel %vm1296, %v1563, 0.0
    %1638 = vadd.xlane.f32.xlu0 %v1637
    %v1639 = vpop.xlane.xlu0 %1638
    %v1640 = vsel %vm1296, %v1564, 0.0
    %1641 = vadd.xlane.f32.xlu0 %v1640
    %v1642 = vpop.xlane.xlu0 %1641
    %v1643 = vsel %vm1296, %v1565, 0.0
    %1644 = vadd.xlane.f32.xlu0 %v1643
    %v1645 = vpop.xlane.xlu0 %1644
    %v1646 = vsel %vm1296, %v1566, 0.0
    %1647 = vadd.xlane.f32.xlu0 %v1646
    %v1648 = vpop.xlane.xlu0 %1647
    %v1649 = vsel %vm1296, %v1567, 0.0
    %1650 = vadd.xlane.f32.xlu0 %v1649
    %v1651 = vpop.xlane.xlu0 %1650
    %v1652 = vsel %vm1296, %v1568, 0.0
    %1653 = vadd.xlane.f32.xlu0 %v1652
    %v1654 = vpop.xlane.xlu0 %1653
    %v1655 = vsel %vm1296, %v1569, 0.0
    %1656 = vadd.xlane.f32.xlu0 %v1655
    %v1657 = vpop.xlane.xlu0 %1656
    %v1658 = vsel %vm1296, %v1570, 0.0
    %1659 = vadd.xlane.f32.xlu0 %v1658
    %v1660 = vpop.xlane.xlu0 %1659
    %v1661 = vsel %vm1296, %v1571, 0.0
    %1662 = vadd.xlane.f32.xlu0 %v1661
    %v1663 = vpop.xlane.xlu0 %1662
    %v1664 = vsel %vm1296, %v1572, 0.0
    %1665 = vadd.xlane.f32.xlu0 %v1664
    %v1666 = vpop.xlane.xlu0 %1665
    %v1667 = vsel %vm1296, %v1573, 0.0
    %1668 = vadd.xlane.f32.xlu0 %v1667
    %v1669 = vpop.xlane.xlu0 %1668
    %v1670 = vld [vmem:[#allocation2] sm:$0x1]
    %v1672 = vperm.slane %v1670, 0
    %1673 = vset.pattern.permute.xlu0 0
    %1674 = vperm.xlu0 %1673, %v1672
    %v1675 = vpop.permute.xlu0 %1674
    %v1677 = vadd.f32 %v1576, %v1675
    %v1678 = vadd.f32 %v1579, %v1675
    %v1679 = vadd.f32 %v1582, %v1675
    %v1680 = vadd.f32 %v1585, %v1675
    %v1681 = vadd.f32 %v1588, %v1675
    %v1682 = vadd.f32 %v1591, %v1675
    %v1683 = vadd.f32 %v1594, %v1675
    %v1684 = vadd.f32 %v1597, %v1675
    %v1685 = vadd.f32 %v1600, %v1675
    %v1686 = vadd.f32 %v1603, %v1675
    %v1687 = vadd.f32 %v1606, %v1675
    %v1688 = vadd.f32 %v1609, %v1675
    %v1689 = vadd.f32 %v1612, %v1675
    %v1690 = vadd.f32 %v1615, %v1675
    %v1691 = vadd.f32 %v1618, %v1675
    %v1692 = vadd.f32 %v1621, %v1675
    %v1693 = vadd.f32 %v1624, %v1675
    %v1694 = vadd.f32 %v1627, %v1675
    %v1695 = vadd.f32 %v1630, %v1675
    %v1696 = vadd.f32 %v1633, %v1675
    %v1697 = vadd.f32 %v1636, %v1675
    %v1698 = vadd.f32 %v1639, %v1675
    %v1699 = vadd.f32 %v1642, %v1675
    %v1700 = vadd.f32 %v1645, %v1675
    %v1701 = vadd.f32 %v1648, %v1675
    %v1702 = vadd.f32 %v1651, %v1675
    %v1703 = vadd.f32 %v1654, %v1675
    %v1704 = vadd.f32 %v1657, %v1675
    %v1705 = vadd.f32 %v1660, %v1675
    %v1706 = vadd.f32 %v1663, %v1675
    %v1707 = vadd.f32 %v1666, %v1675
    %v1708 = vadd.f32 %v1669, %v1675
    %v1741 = vlaneseq
    %v1742 = vand.u32 %v1741, 127
    %v1743 = vperm.slane %v1677, %v1742
    %v1744 = vadd.s32 %v1742, 4294967288
    %v1745 = vperm.slane %v1678, %v1744
    %vm1746 = vcmask 130112
    %v1747 = vsel %vm1746, %v1745, %v1743
    %v1748 = vadd.s32 %v1742, 4294967280
    %v1749 = vperm.slane %v1679, %v1748
    %vm1750 = vcmask 195712
    %v1751 = vsel %vm1750, %v1749, %v1747
    %v1752 = vadd.s32 %v1742, 4294967272
    %v1753 = vperm.slane %v1680, %v1752
    %vm1754 = vcmask 261312
    %v1755 = vsel %vm1754, %v1753, %v1751
    %v1756 = vadd.s32 %v1742, 4294967264
    %v1757 = vperm.slane %v1681, %v1756
    %vm1758 = vcmask 326912
    %v1759 = vsel %vm1758, %v1757, %v1755
    %v1760 = vadd.s32 %v1742, 4294967256
    %v1761 = vperm.slane %v1682, %v1760
    %vm1762 = vcmask 392512
    %v1763 = vsel %vm1762, %v1761, %v1759
    %v1764 = vadd.s32 %v1742, 4294967248
    %v1765 = vperm.slane %v1683, %v1764
    %vm1766 = vcmask 458112
    %v1767 = vsel %vm1766, %v1765, %v1763
    %v1768 = vadd.s32 %v1742, 4294967240
    %v1769 = vperm.slane %v1684, %v1768
    %vm1770 = vcmask 523712
    %v1771 = vsel %vm1770, %v1769, %v1767
    %v1772 = vadd.s32 %v1742, 4294967232
    %v1773 = vperm.slane %v1685, %v1772
    %vm1774 = vcmask 589312
    %v1775 = vsel %vm1774, %v1773, %v1771
    %v1776 = vadd.s32 %v1742, 4294967224
    %v1777 = vperm.slane %v1686, %v1776
    %vm1778 = vcmask 654912
    %v1779 = vsel %vm1778, %v1777, %v1775
    %v1780 = vadd.s32 %v1742, 4294967216
    %v1781 = vperm.slane %v1687, %v1780
    %vm1782 = vcmask 720512
    %v1783 = vsel %vm1782, %v1781, %v1779
    %v1784 = vadd.s32 %v1742, 4294967208
    %v1785 = vperm.slane %v1688, %v1784
    %vm1786 = vcmask 786112
    %v1787 = vsel %vm1786, %v1785, %v1783
    %v1788 = vadd.s32 %v1742, 4294967200
    %v1789 = vperm.slane %v1689, %v1788
    %vm1790 = vcmask 851712
    %v1791 = vsel %vm1790, %v1789, %v1787
    %v1792 = vadd.s32 %v1742, 4294967192
    %v1793 = vperm.slane %v1690, %v1792
    %vm1794 = vcmask 917312
    %v1795 = vsel %vm1794, %v1793, %v1791
    %v1796 = vadd.s32 %v1742, 4294967184
    %v1797 = vperm.slane %v1691, %v1796
    %vm1798 = vcmask 982912
    %v1799 = vsel %vm1798, %v1797, %v1795
    %v1800 = vadd.s32 %v1742, 4294967176
    %v1801 = vperm.slane %v1692, %v1800
    %vm1802 = vcmask 1048512
    %v1803 = vsel %vm1802, %v1801, %v1799
    %v1804 = vperm.slane %v1693, %v1742
    %v1805 = vperm.slane %v1694, %v1744
    %v1806 = vsel %vm1746, %v1805, %v1804
    %v1807 = vperm.slane %v1695, %v1748
    %v1808 = vsel %vm1750, %v1807, %v1806
    %v1809 = vperm.slane %v1696, %v1752
    %v1810 = vsel %vm1754, %v1809, %v1808
    %v1811 = vperm.slane %v1697, %v1756
    %v1812 = vsel %vm1758, %v1811, %v1810
    %v1813 = vperm.slane %v1698, %v1760
    %v1814 = vsel %vm1762, %v1813, %v1812
    %v1815 = vperm.slane %v1699, %v1764
    %v1816 = vsel %vm1766, %v1815, %v1814
    %v1817 = vperm.slane %v1700, %v1768
    %v1818 = vsel %vm1770, %v1817, %v1816
    %v1819 = vperm.slane %v1701, %v1772
    %v1820 = vsel %vm1774, %v1819, %v1818
    %v1821 = vperm.slane %v1702, %v1776
    %v1822 = vsel %vm1778, %v1821, %v1820
    %v1823 = vperm.slane %v1703, %v1780
    %v1824 = vsel %vm1782, %v1823, %v1822
    %v1825 = vperm.slane %v1704, %v1784
    %v1826 = vsel %vm1786, %v1825, %v1824
    %v1827 = vperm.slane %v1705, %v1788
    %v1828 = vsel %vm1790, %v1827, %v1826
    %v1829 = vperm.slane %v1706, %v1792
    %v1830 = vsel %vm1794, %v1829, %v1828
    %v1831 = vperm.slane %v1707, %v1796
    %v1832 = vsel %vm1798, %v1831, %v1830
    %v1833 = vperm.slane %v1708, %v1800
    %v1834 = vsel %vm1802, %v1833, %v1832
    %vm1835 = vcmask 1041409
    %v1836 = vsel %vm1835, %v1834, %v1803
    %1838 = vst [vmem:[#allocation3] sm:$0x3] %v1836
    // Predicated region
    $region30: #{tpu_custom_call.1} parent=1 // pred_check
      _
    $region31: #{tpu_custom_call.1} parent=1 // pred_check_branch
      %1840 = sbr.rel (0) target = $region33
    $region32: #{tpu_custom_call.1} parent=1 // pred_region
      %1842 = vsyncadd [#allocation4], 0
      %s1844 = sshll.u32 [#allocation3], 4
      %s1845 = int_to_ptr.vmem [resolvable:$true] %s1844
      %s1846 = sshll.u32 %s7, 4
      %s1847 = int_to_ptr.hbm [resolvable:$true] %s1846
      %1849 = dma.vmem_to_hbm [thread:$0]  %s1845, 32, %s1847, [#allocation4]
    $region33: #{tpu_custom_call.1} parent=1 // pred_fallthru
      _
    // Predicated region
    $region34: #{tpu_custom_call.1} parent=1 // pred_check
      _
    $region35: #{tpu_custom_call.1} parent=1 // pred_check_branch
      %1851 = sbr.rel (0) target = $region37
    $region36: #{tpu_custom_call.1} parent=1 // pred_region
      %1853 = dma.done [#allocation4], 32
    $region37: #{tpu_custom_call.1} parent=1 // pred_fallthru
      _
    %1854 = vsyncpa [#allocation4], 1

</llo_original>
